<compile_context>
chip_gen: v6e
topology: v6e:2x2x1
jax: 0.10.0
libtpu: 0.0.40
codegen_flags: <defaults>
</compile_context>

<pallas_src>
import math
import functools

import jax
import jax.numpy as jnp
from jax import lax
from jax.experimental import pallas as pl
from jax.experimental.pallas import tpu as pltpu


# ----------------------------- fused MHA kernel (one batch element / step) ----
def _fused_mha_kernel(x_ref, wqkv_ref, bqkv_ref, wo_ref, bo_ref, *rest,
                      num_heads, head_dim, matmul_dtype, with_probs,
                      approx_recip):
    if with_probs:
        out_ref, probs_ref, qkv_scr, ctx_scr = rest
    else:
        out_ref, qkv_scr, ctx_scr = rest
        probs_ref = None

    D = num_heads * head_dim
    x = x_ref[0].astype(matmul_dtype)                        # (T, D)

    # One lane-dense QKV projection feeding all heads (1/sqrt(head_dim) already
    # folded into the Q columns of wqkv/bqkv by prepare_params).  Accumulate in
    # f32 and stash the post-bias result once, in the matmul dtype.
    qkv = jnp.dot(x, wqkv_ref[...], preferred_element_type=jnp.float32)
    qkv_scr[...] = (qkv + bqkv_ref[...]).astype(qkv_scr.dtype)   # (T, 3D)

    # TODO(synk): switch to lax.fori_loop over heads once dynamic lane-offset
    # (pl.ds) slicing at non-128 offsets is robust; static unroll keeps every
    # scratch slice offset static.
    for h in range(num_heads):                               # static head loop
        lo = h * head_dim
        q = qkv_scr[:, lo:lo + head_dim]                     # (T, dh)
        k = qkv_scr[:, D + lo:D + lo + head_dim]
        v = qkv_scr[:, 2 * D + lo:2 * D + lo + head_dim]

        # scores = q @ k^T without materializing the transpose.
        scores = lax.dot_general(q, k, (((1,), (1,)), ((), ())),
                                 preferred_element_type=jnp.float32)  # (T, T)

        # Numerically-stable softmax in f32 (VPU/EUP).
        m = jnp.max(scores, axis=-1, keepdims=True)
        e = jnp.exp(scores - m)
        denom = jnp.sum(e, axis=-1, keepdims=True)
        if approx_recip:
            probs = e * pl.reciprocal(denom, approx=True)    # EUP, fast path
        else:
            probs = e / denom                                # exact, f32 path
        # TODO(synk): attention_probs dropout is identity in eval mode; skipped.

        if probs_ref is not None:
            probs_ref[0, h] = probs.astype(probs_ref.dtype)

        ctx = jnp.dot(probs.astype(matmul_dtype), v,
                      preferred_element_type=jnp.float32)    # (T, dh)
        ctx_scr[:, lo:lo + head_dim] = ctx.astype(ctx_scr.dtype)

    # Single fused output projection over all heads: (T, D) @ (D, D).
    out = jnp.dot(ctx_scr[...], wo_ref[...], preferred_element_type=jnp.float32)
    # TODO(synk): hidden (output) dropout is identity in eval mode; skipped.
    out_ref[0] = (out + bo_ref[...]).astype(out_ref.dtype)


# ----------------------------- helpers -----------------------------------------
def _const_spec(shape):
    """BlockSpec for an operand that is constant across the grid.

    Single-buffered (pl.Buffered(1)) so weights are not pointlessly
    double-buffered in VMEM; falls back to a plain spec on older jax.
    """
    index_map = lambda b: (0,) * len(shape)
    try:
        return pl.BlockSpec(shape, index_map, pipeline_mode=pl.Buffered(1))
    except Exception:
        return pl.BlockSpec(shape, index_map)


def _vmem_limit_bytes(T, D, H, x_dtype, out_dtype, matmul_dtype,
                      output_attentions, probs_dtype):
    """Right-size the VMEM request: footprint + 25% headroom, <=75% physical."""
    nbytes = lambda dt: jnp.dtype(dt).itemsize
    wb = nbytes(matmul_dtype)
    footprint = 2 * T * D * nbytes(x_dtype)            # x block (double-buffered)
    footprint += 2 * T * D * nbytes(out_dtype)         # out block (double-buffered)
    footprint += (3 * D * D + D * D) * wb              # weights (single-buffered)
    footprint += 4 * (3 * D + D)                       # f32 biases
    footprint += (3 * D * T + D * T) * wb              # qkv / ctx VMEM scratch
    if output_attentions:
        footprint += 2 * H * T * T * nbytes(probs_dtype)
    try:
        physical = pltpu.get_tpu_info().vmem_capacity_bytes
    except Exception:
        physical = 128 * 1024 * 1024
    return int(min(max(footprint * 5 // 4, 32 * 1024 * 1024),
                   physical * 3 // 4))


# ----------------------------- wrapper ------------------------------------------
def multi_head_attention(x, prepared_params, num_heads, *,
                         output_attentions=False, out_dtype=None,
                         probs_dtype=jnp.float32):
    """x: (B, T, D).  prepared_params: output of prepare_params()."""
    B, T, D = x.shape
    dh = D // num_heads
    w_qkv = prepared_params["w_qkv"]        # (D, 3D), matmul dtype, Q pre-scaled
    b_qkv = prepared_params["b_qkv"]        # (1, 3D), f32,          Q pre-scaled
    wo = prepared_params["wo"]              # (D, D),  matmul dtype
    bo = prepared_params["bo"]              # (1, D),  f32
    matmul_dtype = jnp.dtype(w_qkv.dtype)
    out_dtype = jnp.dtype(x.dtype if out_dtype is None else out_dtype)
    approx_recip = matmul_dtype != jnp.dtype(jnp.float32)

    kernel = functools.partial(
        _fused_mha_kernel, num_heads=num_heads, head_dim=dh,
        matmul_dtype=matmul_dtype, with_probs=output_attentions,
        approx_recip=approx_recip)

    out_shapes = [jax.ShapeDtypeStruct((B, T, D), out_dtype)]
    out_specs = [pl.BlockSpec((1, T, D), lambda b: (b, 0, 0))]
    if output_attentions:
        out_shapes.append(
            jax.ShapeDtypeStruct((B, num_heads, T, T), jnp.dtype(probs_dtype)))
        out_specs.append(
            pl.BlockSpec((1, num_heads, T, T), lambda b: (b, 0, 0, 0)))

    # TODO(synk): if B can be 1 on v7x (2 TensorCores/chip), add a second
    # parallel grid axis over query-row blocks so both cores get work.
    results = pl.pallas_call(
        kernel,
        out_shape=tuple(out_shapes),
        grid_spec=pltpu.PrefetchScalarGridSpec(
            num_scalar_prefetch=0,
            grid=(B,),
            in_specs=[
                pl.BlockSpec((1, T, D), lambda b: (b, 0, 0)),   # x
                _const_spec((D, 3 * D)),                        # w_qkv
                _const_spec((1, 3 * D)),                        # b_qkv
                _const_spec((D, D)),                            # wo
                _const_spec((1, D)),                            # bo
            ],
            out_specs=tuple(out_specs),
            scratch_shapes=[
                pltpu.VMEM((T, 3 * D), matmul_dtype),           # post-bias QKV
                pltpu.VMEM((T, D), matmul_dtype),               # per-head ctx
            ]),
        compiler_params=pltpu.CompilerParams(
            dimension_semantics=("parallel",),       # batch shards across TCs
            vmem_limit_bytes=_vmem_limit_bytes(
                T, D, num_heads, x.dtype, out_dtype, matmul_dtype,
                output_attentions, probs_dtype)),
    )(x, w_qkv, b_qkv, wo, bo)

    attn_out = results[0]
    if not output_attentions:
        return attn_out, None
    # match torch.stack(per_head_probs, dim=-1) -> (B, T, T, H); debug path only.
    return attn_out, jnp.transpose(results[1], (0, 2, 3, 1))


# ----------------------------- parameters ----------------------------------------
def init_params(key, hidden_size, num_heads, dtype=jnp.float32):
    """Canonical (unscaled) fused QKV + output-projection parameters."""
    del num_heads  # layout is fused; the head split happens in the kernel
    ks = jax.random.split(key, 4)
    bound = 1.0 / math.sqrt(hidden_size)
    u = lambda k, shape: jax.random.uniform(k, shape, dtype, -bound, bound)
    return {
        "w_qkv": u(ks[0], (hidden_size, 3 * hidden_size)),  # [Q | K | V], (in, out)
        "b_qkv": u(ks[1], (1, 3 * hidden_size)),
        "wo": u(ks[2], (hidden_size, hidden_size)),
        "bo": u(ks[3], (1, hidden_size)),
    }


def prepare_params(params, num_heads, matmul_dtype=jnp.bfloat16):
    """One-time host transform: fold 1/sqrt(head_dim) into the Q columns and
    cast the MXU operands to the matmul dtype (biases stay f32)."""
    D = params["wo"].shape[0]
    head_dim = D // num_heads
    scale = 1.0 / math.sqrt(head_dim)
    col_scale = jnp.concatenate(
        [jnp.full((D,), scale, jnp.float32), jnp.ones((2 * D,), jnp.float32)])
    w_qkv = params["w_qkv"].astype(jnp.float32) * col_scale[None, :]
    b_qkv = params["b_qkv"].astype(jnp.float32) * col_scale[None, :]
    return {
        "w_qkv": w_qkv.astype(matmul_dtype),
        "b_qkv": b_qkv,                                   # f32
        "wo": params["wo"].astype(matmul_dtype),
        "bo": params["bo"].astype(jnp.float32),
    }


# ----------------------------- pure-JAX reference --------------------------------
def _mha_reference(x, params, num_heads):
    B, T, D = x.shape
    dh = D // num_heads
    qkv = x @ params["w_qkv"] + params["b_qkv"]          # (B, T, 3D)
    q, k, v = jnp.split(qkv, 3, axis=-1)

    def split_heads(t):                                  # (B,T,D)->(B,H,T,dh)
        return t.reshape(B, T, num_heads, dh).transpose(0, 2, 1, 3)

    q, k, v = split_heads(q), split_heads(k), split_heads(v)
    scores = jnp.einsum("bhqd,bhkd->bhqk", q, k) / math.sqrt(dh)
    probs = jax.nn.softmax(scores, axis=-1)
    ctx = jnp.einsum("bhqk,bhkd->bhqd", probs, v)
    concat = ctx.transpose(0, 2, 1, 3).reshape(B, T, D)
    out = concat @ params["wo"] + params["bo"]
    return out, jnp.transpose(probs, (0, 2, 3, 1))


if __name__ == "__main__":
    B, T, D, H = 2, 8, 32, 4   # batch, seq_len, hidden_size, num_attention_heads

    key = jax.random.PRNGKey(0)
    kx, kp = jax.random.split(key)
    x = jax.random.normal(kx, (B, T, D), jnp.float32)
    params = init_params(kp, D, H)

    # f32-matmul variant (with probs) — correctness check vs pure-JAX reference.
    prep_f32 = prepare_params(params, H, matmul_dtype=jnp.float32)
    out_f32, probs_f32 = multi_head_attention(
        x, prep_f32, H, output_attentions=True)
    jax.block_until_ready(out_f32)
    jax.block_until_ready(probs_f32)
    ref_out, ref_probs = _mha_reference(x, params, H)
    assert out_f32.shape == (B, T, D)
    assert probs_f32.shape == (B, T, T, H)
    assert jnp.allclose(out_f32, ref_out, atol=2e-3, rtol=2e-3)
    assert jnp.allclose(probs_f32, ref_probs, atol=2e-3, rtol=2e-3)

    # Default fast path: bf16 MXU operands, no probs writeback.
    prep_bf16 = prepare_params(params, H, matmul_dtype=jnp.bfloat16)
    out_fast, none_probs = multi_head_attention(
        x, prep_bf16, H, output_attentions=False)
    jax.block_until_ready(out_fast)
    assert out_fast.shape == (B, T, D)
    assert none_probs is None
    assert bool(jnp.all(jnp.isfinite(out_fast)))

    print("KERNEL_OK")
</pallas_src>

<mosaic_0001>
module attributes {stable_mosaic.version = 11 : i64} {
  func.func @_fused_mha_kernel(%arg0: i32, %arg1: memref<1x8x32xf32, #tpu.memory_space<vmem>>, %arg2: memref<32x96xf32, #tpu.memory_space<vmem>>, %arg3: memref<1x96xf32, #tpu.memory_space<vmem>>, %arg4: memref<32x32xf32, #tpu.memory_space<vmem>>, %arg5: memref<1x32xf32, #tpu.memory_space<vmem>>, %arg6: memref<1x8x32xf32, #tpu.memory_space<vmem>>, %arg7: memref<1x4x8x8xf32, #tpu.memory_space<vmem>>, %arg8: memref<8x96xf32, #tpu.memory_space<vmem>>, %arg9: memref<8x32xf32, #tpu.memory_space<vmem>>) attributes {dimension_semantics = [#tpu.dimension_semantics<parallel>], iteration_bounds = array<i64: 2>, scalar_prefetch = 0 : i64, scratch_operands = 2 : i64, tpu.core_type = #tpu.core_type<tc>, window_params = [{transform_indices = @transform_0, window_bounds = array<i64: 1, 8, 32>}, {pipeline_mode = #tpu.pipeline_mode<synchronous>, transform_indices = @transform_1, window_bounds = array<i64: 32, 96>}, {pipeline_mode = #tpu.pipeline_mode<synchronous>, transform_indices = @transform_2, window_bounds = array<i64: 1, 96>}, {pipeline_mode = #tpu.pipeline_mode<synchronous>, transform_indices = @transform_3, window_bounds = array<i64: 32, 32>}, {pipeline_mode = #tpu.pipeline_mode<synchronous>, transform_indices = @transform_4, window_bounds = array<i64: 1, 32>}, {transform_indices = @transform_5, window_bounds = array<i64: 1, 8, 32>}, {transform_indices = @transform_6, window_bounds = array<i64: 1, 4, 8, 8>}]} {
    %c0 = arith.constant 0 : index
    %c0_0 = arith.constant 0 : index
    %c0_1 = arith.constant 0 : index
    %0 = vector.load %arg1[%c0, %c0_0, %c0_1] : memref<1x8x32xf32, #tpu.memory_space<vmem>>, vector<1x8x32xf32>
    %1 = vector.shape_cast %0 : vector<1x8x32xf32> to vector<8x32xf32>
    %c0_2 = arith.constant 0 : index
    %c0_3 = arith.constant 0 : index
    %2 = vector.load %arg2[%c0_2, %c0_3] : memref<32x96xf32, #tpu.memory_space<vmem>>, vector<32x96xf32>
    %cst = arith.constant dense<0.000000e+00> : vector<8x96xf32>
    %3 = tpu.matmul %1, %2, %cst {dimension_numbers = #tpu.dot_dimension_numbers<[1], [0], [0], [1], [0, 0, 1, 1], [], []>} : vector<8x32xf32>, vector<32x96xf32>, vector<8x96xf32> -> vector<8x96xf32>
    %c0_4 = arith.constant 0 : index
    %c0_5 = arith.constant 0 : index
    %4 = vector.load %arg3[%c0_4, %c0_5] : memref<1x96xf32, #tpu.memory_space<vmem>>, vector<1x96xf32>
    %5 = vector.broadcast %4 : vector<1x96xf32> to vector<8x96xf32>
    %6 = arith.addf %3, %5 : vector<8x96xf32>
    %c0_6 = arith.constant 0 : index
    %c0_7 = arith.constant 0 : index
    %7 = vector.load %arg8[%c0_6, %c0_7] : memref<8x96xf32, #tpu.memory_space<vmem>>, vector<8x96xf32>
    tpu.vector_store %arg8[%c0_6, %c0_7], %6 {strides = array<i32>} : memref<8x96xf32, #tpu.memory_space<vmem>>, vector<8x96xf32>,
    %c0_8 = arith.constant 0 : index
    %c0_9 = arith.constant 0 : index
    %8 = vector.load %arg8[%c0_8, %c0_9] : memref<8x96xf32, #tpu.memory_space<vmem>>, vector<8x8xf32>
    %c0_10 = arith.constant 0 : index
    %c32 = arith.constant 32 : index
    %9 = vector.load %arg8[%c0_10, %c32] : memref<8x96xf32, #tpu.memory_space<vmem>>, vector<8x8xf32>
    %c0_11 = arith.constant 0 : index
    %c64 = arith.constant 64 : index
    %10 = vector.load %arg8[%c0_11, %c64] : memref<8x96xf32, #tpu.memory_space<vmem>>, vector<8x8xf32>
    %cst_12 = arith.constant dense<0.000000e+00> : vector<8x8xf32>
    %11 = tpu.matmul %8, %9, %cst_12 {dimension_numbers = #tpu.dot_dimension_numbers<[1], [1], [0], [0], [0, 0, 1, 0], [], []>} : vector<8x8xf32>, vector<8x8xf32>, vector<8x8xf32> -> vector<8x8xf32>
    %cst_13 = arith.constant dense<0xFF800000> : vector<8xf32>
    %12 = vector.multi_reduction <maximumf>, %11, %cst_13 [1] : vector<8x8xf32> to vector<8xf32>
    %13 = vector.shape_cast %12 : vector<8xf32> to vector<8x1xf32>
    %14 = vector.broadcast %13 : vector<8x1xf32> to vector<8x8xf32>
    %15 = arith.subf %11, %14 : vector<8x8xf32>
    %16 = math.exp %15 : vector<8x8xf32>
    %cst_14 = arith.constant dense<0.000000e+00> : vector<8xf32>
    %17 = vector.multi_reduction <add>, %16, %cst_14 [1] : vector<8x8xf32> to vector<8xf32>
    %18 = vector.shape_cast %17 : vector<8xf32> to vector<8x1xf32>
    %19 = vector.broadcast %18 : vector<8x1xf32> to vector<8x8xf32>
    %20 = arith.divf %16, %19 : vector<8x8xf32>
    %c0_15 = arith.constant 0 : index
    %c0_16 = arith.constant 0 : index
    %c0_17 = arith.constant 0 : index
    %c0_18 = arith.constant 0 : index
    %21 = vector.load %arg7[%c0_15, %c0_16, %c0_17, %c0_18] : memref<1x4x8x8xf32, #tpu.memory_space<vmem>>, vector<1x1x8x8xf32>
    %22 = vector.shape_cast %21 : vector<1x1x8x8xf32> to vector<8x8xf32>
    %23 = vector.shape_cast %20 : vector<8x8xf32> to vector<1x1x8x8xf32>
    tpu.vector_store %arg7[%c0_15, %c0_16, %c0_17, %c0_18], %23 {strides = array<i32>} : memref<1x4x8x8xf32, #tpu.memory_space<vmem>>, vector<1x1x8x8xf32>,
    %cst_19 = arith.constant dense<0.000000e+00> : vector<8x8xf32>
    %24 = tpu.matmul %20, %10, %cst_19 {dimension_numbers = #tpu.dot_dimension_numbers<[1], [0], [0], [1], [0, 0, 1, 1], [], []>} : vector<8x8xf32>, vector<8x8xf32>, vector<8x8xf32> -> vector<8x8xf32>
    %c0_20 = arith.constant 0 : index
    %c0_21 = arith.constant 0 : index
    %25 = vector.load %arg9[%c0_20, %c0_21] : memref<8x32xf32, #tpu.memory_space<vmem>>, vector<8x8xf32>
    tpu.vector_store %arg9[%c0_20, %c0_21], %24 {strides = array<i32>} : memref<8x32xf32, #tpu.memory_space<vmem>>, vector<8x8xf32>,
    %c0_22 = arith.constant 0 : index
    %c8 = arith.constant 8 : index
    %26 = vector.load %arg8[%c0_22, %c8] : memref<8x96xf32, #tpu.memory_space<vmem>>, vector<8x8xf32>
    %c0_23 = arith.constant 0 : index
    %c40 = arith.constant 40 : index
    %27 = vector.load %arg8[%c0_23, %c40] : memref<8x96xf32, #tpu.memory_space<vmem>>, vector<8x8xf32>
    %c0_24 = arith.constant 0 : index
    %c72 = arith.constant 72 : index
    %28 = vector.load %arg8[%c0_24, %c72] : memref<8x96xf32, #tpu.memory_space<vmem>>, vector<8x8xf32>
    %cst_25 = arith.constant dense<0.000000e+00> : vector<8x8xf32>
    %29 = tpu.matmul %26, %27, %cst_25 {dimension_numbers = #tpu.dot_dimension_numbers<[1], [1], [0], [0], [0, 0, 1, 0], [], []>} : vector<8x8xf32>, vector<8x8xf32>, vector<8x8xf32> -> vector<8x8xf32>
    %cst_26 = arith.constant dense<0xFF800000> : vector<8xf32>
    %30 = vector.multi_reduction <maximumf>, %29, %cst_26 [1] : vector<8x8xf32> to vector<8xf32>
    %31 = vector.shape_cast %30 : vector<8xf32> to vector<8x1xf32>
    %32 = vector.broadcast %31 : vector<8x1xf32> to vector<8x8xf32>
    %33 = arith.subf %29, %32 : vector<8x8xf32>
    %34 = math.exp %33 : vector<8x8xf32>
    %cst_27 = arith.constant dense<0.000000e+00> : vector<8xf32>
    %35 = vector.multi_reduction <add>, %34, %cst_27 [1] : vector<8x8xf32> to vector<8xf32>
    %36 = vector.shape_cast %35 : vector<8xf32> to vector<8x1xf32>
    %37 = vector.broadcast %36 : vector<8x1xf32> to vector<8x8xf32>
    %38 = arith.divf %34, %37 : vector<8x8xf32>
    %c0_28 = arith.constant 0 : index
    %c1 = arith.constant 1 : index
    %c0_29 = arith.constant 0 : index
    %c0_30 = arith.constant 0 : index
    %39 = vector.load %arg7[%c0_28, %c1, %c0_29, %c0_30] : memref<1x4x8x8xf32, #tpu.memory_space<vmem>>, vector<1x1x8x8xf32>
    %40 = vector.shape_cast %39 : vector<1x1x8x8xf32> to vector<8x8xf32>
    %41 = vector.shape_cast %38 : vector<8x8xf32> to vector<1x1x8x8xf32>
    tpu.vector_store %arg7[%c0_28, %c1, %c0_29, %c0_30], %41 {strides = array<i32>} : memref<1x4x8x8xf32, #tpu.memory_space<vmem>>, vector<1x1x8x8xf32>,
    %cst_31 = arith.constant dense<0.000000e+00> : vector<8x8xf32>
    %42 = tpu.matmul %38, %28, %cst_31 {dimension_numbers = #tpu.dot_dimension_numbers<[1], [0], [0], [1], [0, 0, 1, 1], [], []>} : vector<8x8xf32>, vector<8x8xf32>, vector<8x8xf32> -> vector<8x8xf32>
    %c0_32 = arith.constant 0 : index
    %c8_33 = arith.constant 8 : index
    %43 = vector.load %arg9[%c0_32, %c8_33] : memref<8x32xf32, #tpu.memory_space<vmem>>, vector<8x8xf32>
    tpu.vector_store %arg9[%c0_32, %c8_33], %42 {strides = array<i32>} : memref<8x32xf32, #tpu.memory_space<vmem>>, vector<8x8xf32>,
    %c0_34 = arith.constant 0 : index
    %c16 = arith.constant 16 : index
    %44 = vector.load %arg8[%c0_34, %c16] : memref<8x96xf32, #tpu.memory_space<vmem>>, vector<8x8xf32>
    %c0_35 = arith.constant 0 : index
    %c48 = arith.constant 48 : index
    %45 = vector.load %arg8[%c0_35, %c48] : memref<8x96xf32, #tpu.memory_space<vmem>>, vector<8x8xf32>
    %c0_36 = arith.constant 0 : index
    %c80 = arith.constant 80 : index
    %46 = vector.load %arg8[%c0_36, %c80] : memref<8x96xf32, #tpu.memory_space<vmem>>, vector<8x8xf32>
    %cst_37 = arith.constant dense<0.000000e+00> : vector<8x8xf32>
    %47 = tpu.matmul %44, %45, %cst_37 {dimension_numbers = #tpu.dot_dimension_numbers<[1], [1], [0], [0], [0, 0, 1, 0], [], []>} : vector<8x8xf32>, vector<8x8xf32>, vector<8x8xf32> -> vector<8x8xf32>
    %cst_38 = arith.constant dense<0xFF800000> : vector<8xf32>
    %48 = vector.multi_reduction <maximumf>, %47, %cst_38 [1] : vector<8x8xf32> to vector<8xf32>
    %49 = vector.shape_cast %48 : vector<8xf32> to vector<8x1xf32>
    %50 = vector.broadcast %49 : vector<8x1xf32> to vector<8x8xf32>
    %51 = arith.subf %47, %50 : vector<8x8xf32>
    %52 = math.exp %51 : vector<8x8xf32>
    %cst_39 = arith.constant dense<0.000000e+00> : vector<8xf32>
    %53 = vector.multi_reduction <add>, %52, %cst_39 [1] : vector<8x8xf32> to vector<8xf32>
    %54 = vector.shape_cast %53 : vector<8xf32> to vector<8x1xf32>
    %55 = vector.broadcast %54 : vector<8x1xf32> to vector<8x8xf32>
    %56 = arith.divf %52, %55 : vector<8x8xf32>
    %c0_40 = arith.constant 0 : index
    %c2 = arith.constant 2 : index
    %c0_41 = arith.constant 0 : index
    %c0_42 = arith.constant 0 : index
    %57 = vector.load %arg7[%c0_40, %c2, %c0_41, %c0_42] : memref<1x4x8x8xf32, #tpu.memory_space<vmem>>, vector<1x1x8x8xf32>
    %58 = vector.shape_cast %57 : vector<1x1x8x8xf32> to vector<8x8xf32>
    %59 = vector.shape_cast %56 : vector<8x8xf32> to vector<1x1x8x8xf32>
    tpu.vector_store %arg7[%c0_40, %c2, %c0_41, %c0_42], %59 {strides = array<i32>} : memref<1x4x8x8xf32, #tpu.memory_space<vmem>>, vector<1x1x8x8xf32>,
    %cst_43 = arith.constant dense<0.000000e+00> : vector<8x8xf32>
    %60 = tpu.matmul %56, %46, %cst_43 {dimension_numbers = #tpu.dot_dimension_numbers<[1], [0], [0], [1], [0, 0, 1, 1], [], []>} : vector<8x8xf32>, vector<8x8xf32>, vector<8x8xf32> -> vector<8x8xf32>
    %c0_44 = arith.constant 0 : index
    %c16_45 = arith.constant 16 : index
    %61 = vector.load %arg9[%c0_44, %c16_45] : memref<8x32xf32, #tpu.memory_space<vmem>>, vector<8x8xf32>
    tpu.vector_store %arg9[%c0_44, %c16_45], %60 {strides = array<i32>} : memref<8x32xf32, #tpu.memory_space<vmem>>, vector<8x8xf32>,
    %c0_46 = arith.constant 0 : index
    %c24 = arith.constant 24 : index
    %62 = vector.load %arg8[%c0_46, %c24] : memref<8x96xf32, #tpu.memory_space<vmem>>, vector<8x8xf32>
    %c0_47 = arith.constant 0 : index
    %c56 = arith.constant 56 : index
    %63 = vector.load %arg8[%c0_47, %c56] : memref<8x96xf32, #tpu.memory_space<vmem>>, vector<8x8xf32>
    %c0_48 = arith.constant 0 : index
    %c88 = arith.constant 88 : index
    %64 = vector.load %arg8[%c0_48, %c88] : memref<8x96xf32, #tpu.memory_space<vmem>>, vector<8x8xf32>
    %cst_49 = arith.constant dense<0.000000e+00> : vector<8x8xf32>
    %65 = tpu.matmul %62, %63, %cst_49 {dimension_numbers = #tpu.dot_dimension_numbers<[1], [1], [0], [0], [0, 0, 1, 0], [], []>} : vector<8x8xf32>, vector<8x8xf32>, vector<8x8xf32> -> vector<8x8xf32>
    %cst_50 = arith.constant dense<0xFF800000> : vector<8xf32>
    %66 = vector.multi_reduction <maximumf>, %65, %cst_50 [1] : vector<8x8xf32> to vector<8xf32>
    %67 = vector.shape_cast %66 : vector<8xf32> to vector<8x1xf32>
    %68 = vector.broadcast %67 : vector<8x1xf32> to vector<8x8xf32>
    %69 = arith.subf %65, %68 : vector<8x8xf32>
    %70 = math.exp %69 : vector<8x8xf32>
    %cst_51 = arith.constant dense<0.000000e+00> : vector<8xf32>
    %71 = vector.multi_reduction <add>, %70, %cst_51 [1] : vector<8x8xf32> to vector<8xf32>
    %72 = vector.shape_cast %71 : vector<8xf32> to vector<8x1xf32>
    %73 = vector.broadcast %72 : vector<8x1xf32> to vector<8x8xf32>
    %74 = arith.divf %70, %73 : vector<8x8xf32>
    %c0_52 = arith.constant 0 : index
    %c3 = arith.constant 3 : index
    %c0_53 = arith.constant 0 : index
    %c0_54 = arith.constant 0 : index
    %75 = vector.load %arg7[%c0_52, %c3, %c0_53, %c0_54] : memref<1x4x8x8xf32, #tpu.memory_space<vmem>>, vector<1x1x8x8xf32>
    %76 = vector.shape_cast %75 : vector<1x1x8x8xf32> to vector<8x8xf32>
    %77 = vector.shape_cast %74 : vector<8x8xf32> to vector<1x1x8x8xf32>
    tpu.vector_store %arg7[%c0_52, %c3, %c0_53, %c0_54], %77 {strides = array<i32>} : memref<1x4x8x8xf32, #tpu.memory_space<vmem>>, vector<1x1x8x8xf32>,
    %cst_55 = arith.constant dense<0.000000e+00> : vector<8x8xf32>
    %78 = tpu.matmul %74, %64, %cst_55 {dimension_numbers = #tpu.dot_dimension_numbers<[1], [0], [0], [1], [0, 0, 1, 1], [], []>} : vector<8x8xf32>, vector<8x8xf32>, vector<8x8xf32> -> vector<8x8xf32>
    %c0_56 = arith.constant 0 : index
    %c24_57 = arith.constant 24 : index
    %79 = vector.load %arg9[%c0_56, %c24_57] : memref<8x32xf32, #tpu.memory_space<vmem>>, vector<8x8xf32>
    tpu.vector_store %arg9[%c0_56, %c24_57], %78 {strides = array<i32>} : memref<8x32xf32, #tpu.memory_space<vmem>>, vector<8x8xf32>,
    %c0_58 = arith.constant 0 : index
    %c0_59 = arith.constant 0 : index
    %80 = vector.load %arg9[%c0_58, %c0_59] : memref<8x32xf32, #tpu.memory_space<vmem>>, vector<8x32xf32>
    %c0_60 = arith.constant 0 : index
    %c0_61 = arith.constant 0 : index
    %81 = vector.load %arg4[%c0_60, %c0_61] : memref<32x32xf32, #tpu.memory_space<vmem>>, vector<32x32xf32>
    %cst_62 = arith.constant dense<0.000000e+00> : vector<8x32xf32>
    %82 = tpu.matmul %80, %81, %cst_62 {dimension_numbers = #tpu.dot_dimension_numbers<[1], [0], [0], [1], [0, 0, 1, 1], [], []>} : vector<8x32xf32>, vector<32x32xf32>, vector<8x32xf32> -> vector<8x32xf32>
    %c0_63 = arith.constant 0 : index
    %c0_64 = arith.constant 0 : index
    %83 = vector.load %arg5[%c0_63, %c0_64] : memref<1x32xf32, #tpu.memory_space<vmem>>, vector<1x32xf32>
    %84 = vector.broadcast %83 : vector<1x32xf32> to vector<8x32xf32>
    %85 = arith.addf %82, %84 : vector<8x32xf32>
    %c0_65 = arith.constant 0 : index
    %c0_66 = arith.constant 0 : index
    %c0_67 = arith.constant 0 : index
    %86 = vector.load %arg6[%c0_65, %c0_66, %c0_67] : memref<1x8x32xf32, #tpu.memory_space<vmem>>, vector<1x8x32xf32>
    %87 = vector.shape_cast %86 : vector<1x8x32xf32> to vector<8x32xf32>
    %88 = vector.shape_cast %85 : vector<8x32xf32> to vector<1x8x32xf32>
    tpu.vector_store %arg6[%c0_65, %c0_66, %c0_67], %88 {strides = array<i32>} : memref<1x8x32xf32, #tpu.memory_space<vmem>>, vector<1x8x32xf32>,
    return
  }
  func.func @transform_0(%arg0: i32) -> (i32, i32, i32) {
    %c0_i32 = arith.constant 0 : i32
    %c0_i32_0 = arith.constant 0 : i32
    %c0_i32_1 = arith.constant 0 : i32
    return %arg0, %c0_i32, %c0_i32_0 : i32, i32, i32
  }
  func.func @transform_1(%arg0: i32) -> (i32, i32) {
    %c0_i32 = arith.constant 0 : i32
    %c0_i32_0 = arith.constant 0 : i32
    %c0_i32_1 = arith.constant 0 : i32
    return %c0_i32, %c0_i32_0 : i32, i32
  }
  func.func @transform_2(%arg0: i32) -> (i32, i32) {
    %c0_i32 = arith.constant 0 : i32
    %c0_i32_0 = arith.constant 0 : i32
    %c0_i32_1 = arith.constant 0 : i32
    return %c0_i32, %c0_i32_0 : i32, i32
  }
  func.func @transform_3(%arg0: i32) -> (i32, i32) {
    %c0_i32 = arith.constant 0 : i32
    %c0_i32_0 = arith.constant 0 : i32
    %c0_i32_1 = arith.constant 0 : i32
    return %c0_i32, %c0_i32_0 : i32, i32
  }
  func.func @transform_4(%arg0: i32) -> (i32, i32) {
    %c0_i32 = arith.constant 0 : i32
    %c0_i32_0 = arith.constant 0 : i32
    %c0_i32_1 = arith.constant 0 : i32
    return %c0_i32, %c0_i32_0 : i32, i32
  }
  func.func @transform_5(%arg0: i32) -> (i32, i32, i32) {
    %c0_i32 = arith.constant 0 : i32
    %c0_i32_0 = arith.constant 0 : i32
    %c0_i32_1 = arith.constant 0 : i32
    return %arg0, %c0_i32, %c0_i32_0 : i32, i32, i32
  }
  func.func @transform_6(%arg0: i32) -> (i32, i32, i32, i32) {
    %c0_i32 = arith.constant 0 : i32
    %c0_i32_0 = arith.constant 0 : i32
    %c0_i32_1 = arith.constant 0 : i32
    %c0_i32_2 = arith.constant 0 : i32
    return %arg0, %c0_i32, %c0_i32_0, %c0_i32_1 : i32, i32, i32, i32
  }
}

</mosaic_0001>

<llo_original>
// kernel: tpu_custom_call.1
$region0: #{tpu_custom_call.1}
  #allocation0 [shape = 'u32[]', space=smem, size = 0x4, offset = 0x4, fixed_abs, tag = 'smem constant byte address 0x4 - core index']
  #allocation1 [shape = 'u32[144,128]{1,0:T(1,128)}', space=vmem, size = 0x12000, scoped, tag = 'internal scratch']
  #allocation2 [shape = 'f32[8,96]{1,0:T(8,128)}', space=vmem, size = 0x1000, scoped, tag = 'scratch operand']
  #allocation3 [shape = 'f32[8,32]{1,0:T(8,128)}', space=vmem, size = 0x1000, scoped, tag = 'scratch operand']
  %s0 = inlined_call_operand.hbm [shape: f32[2,8,32], index: 0, kind: input, shape index: {}]
  %s1 = inlined_call_operand.hbm [shape: f32[32,96], index: 1, kind: input, shape index: {}]
  %s2 = inlined_call_operand.vmem [shape: f32[1,96], index: 2, kind: input, shape index: {}]
  %s3 = inlined_call_operand.hbm [shape: f32[32,32], index: 3, kind: input, shape index: {}]
  %s4 = inlined_call_operand.vmem [shape: f32[1,32], index: 4, kind: input, shape index: {}]
  %s5 = inlined_call_operand.hbm [shape: f32[2,8,32], index: 5, kind: output, shape index: {0}]
  %s6 = inlined_call_operand.hbm [shape: f32[2,4,8,8], index: 6, kind: output, shape index: {1}]
  %7 = xla_tuple %s5, %s6
  %s8 = sld [smem:[#allocation0]]
  $region73: #{tpu_custom_call.1} parent=0
    _
  %s10 = ssub.s32 1, %s8
  %s11 = scalar_select 0, %s10, %s8
  $region1: #{tpu_custom_call.1} parent=0
    #allocation4 [shape = 'u8[8192]{0}', space=vmem, size = 0x2000, scoped, tag = 'input window, operand 0']
    #allocation5 [shape = 's32[2]{0}', space=sflag, size = 0x8, scoped, tag = 'scoped memory for tpu_custom_call.1']
    #allocation6 [shape = 's32[2]{0}', space=sflag, size = 0x8, scoped, tag = 'scoped memory for tpu_custom_call.1']
    #allocation7 [shape = 'u8[16384]{0}', space=vmem, size = 0x4000, scoped, tag = 'input window, operand 1, single buffered']
    #allocation8 [shape = 's32[1]{0}', space=sflag, size = 0x4, scoped, tag = 'scoped memory for tpu_custom_call.1']
    #allocation9 [shape = 'u8[16384]{0}', space=vmem, size = 0x4000, scoped, tag = 'input window, operand 3, single buffered']
    #allocation10 [shape = 'u8[8192]{0}', space=vmem, size = 0x2000, scoped, tag = 'output window, operand 0']
    #allocation11 [shape = 'u8[32768]{0}', space=vmem, size = 0x8000, scoped, tag = 'output window, operand 1']
    #allocation12 [shape = 's32[2]{0}', space=sflag, size = 0x8, scoped, tag = 'scoped memory for tpu_custom_call.1']
    %12 = vsyncpa [#allocation5], 0
    %s13 = scalar_lea.sflag [#allocation5], 1
    %14 = vsyncpa %s13, 0
    %15 = vsyncpa [#allocation8], 0
    %16 = vsyncpa [#allocation6], 0
    %s17 = scalar_lea.sflag [#allocation6], 1
    %18 = vsyncpa %s17, 0
    %19 = vsyncpa [#allocation12], 0
    %s20 = scalar_lea.sflag [#allocation12], 1
    %21 = vsyncpa %s20, 0
    loop: start=0, step=1, limit=4
    $region2: #{tpu_custom_call.1} parent=1 // loop_pre_header
      _
    $region3: #{tpu_custom_call.1} parent=1 // loop_header
      %s23 = sphi 0, %s27
      %p24 = scmp.ge.s32.totalorder %s23, 4
      %s33 = sphi 0, %s35
      %s36 = sphi 0, %s33
      %s37 = sphi 0, %s36
      %s53 = sphi 0, %s37
      %s57 = sphi 0, %s57
      %s59 = sphi 0, %s57
      %s60 = sphi 0, %s59
      %s74 = sphi 0, %s60
      %s78 = sphi 0, %s78
      %s80 = sphi 0, %s78
      %s81 = sphi 0, %s80
      %s95 = sphi 0, %s81
      %s99 = sphi 0, %s99
      %s101 = sphi 0, %s99
      %s102 = sphi 0, %s101
      %s116 = sphi 0, %s102
      %s120 = sphi 0, %s120
      %s122 = sphi 0, %s120
      %s123 = sphi 0, %s122
      %s137 = sphi 0, %s123
      %s143 = sphi 0, %s145
      %s146 = sphi 0, %s143
      %s147 = sphi 0, %s146
      %s163 = sphi 0, %s147
      %s169 = sphi 0, %s171
      %s172 = sphi 0, %s169
      %s173 = sphi 0, %s172
      %s189 = sphi 0, %s173
    $region4: #{tpu_custom_call.1} parent=1 // loop_header_branch
      %26 = sbr.rel (%p24) target = $region8
    $region5: #{tpu_custom_call.1} parent=1 // loop_body
      %s28 = ssub.s32 %s23, 1
      %s29 = ssub.s32 %s23, 2
      %s30 = sadd.s32 %s23, 1
      %s31 = ssub.s32 %s23, %s30
      %p32 = scmp.eq.s32.totalorder %s31, 0
      %s34 = sadd.s32 %s33, 1
      %s35 = scalar_select %p32, %s33, %s34
      %p38 = pneg %p32
      %p39 = scmp.eq.s32.totalorder %s23, 1
      %p40 = por %p38, %p39
      %p41 = scmp.ne.s32.totalorder %s33, %s36
      %p42 = scmp.eq.s32.totalorder %s23, 0
      %p43 = por %p41, %p42
      %p44 = scmp.ne.s32.totalorder %s33, %s36
      %p45 = scmp.eq.s32.totalorder %s28, 1
      %p46 = por %p44, %p45
      %p47 = scmp.ne.s32.totalorder %s36, %s37
      %p48 = scmp.eq.s32.totalorder %s28, 0
      %p49 = por %p47, %p48
      %p50 = scmp.ne.s32.totalorder %s36, %s37
      %p51 = scmp.eq.s32.totalorder %s29, 1
      %p52 = por %p50, %p51
      %p54 = scmp.ne.s32.totalorder %s37, %s53
      %p55 = scmp.eq.s32.totalorder %s29, 0
      %p56 = por %p54, %p55
      %s58 = sadd.s32 %s57, 1
      %p61 = scmp.eq.s32.totalorder %s23, 1
      %p62 = scmp.ne.s32.totalorder %s57, %s59
      %p63 = scmp.eq.s32.totalorder %s23, 0
      %p64 = por %p62, %p63
      %p65 = scmp.ne.s32.totalorder %s57, %s59
      %p66 = scmp.eq.s32.totalorder %s28, 1
      %p67 = por %p65, %p66
      %p68 = scmp.ne.s32.totalorder %s59, %s60
      %p69 = scmp.eq.s32.totalorder %s28, 0
      %p70 = por %p68, %p69
      %p71 = scmp.ne.s32.totalorder %s59, %s60
      %p72 = scmp.eq.s32.totalorder %s29, 1
      %p73 = por %p71, %p72
      %p75 = scmp.ne.s32.totalorder %s60, %s74
      %p76 = scmp.eq.s32.totalorder %s29, 0
      %p77 = por %p75, %p76
      %s79 = sadd.s32 %s78, 1
      %p82 = scmp.eq.s32.totalorder %s23, 1
      %p83 = scmp.ne.s32.totalorder %s78, %s80
      %p84 = scmp.eq.s32.totalorder %s23, 0
      %p85 = por %p83, %p84
      %p86 = scmp.ne.s32.totalorder %s78, %s80
      %p87 = scmp.eq.s32.totalorder %s28, 1
      %p88 = por %p86, %p87
      %p89 = scmp.ne.s32.totalorder %s80, %s81
      %p90 = scmp.eq.s32.totalorder %s28, 0
      %p91 = por %p89, %p90
      %p92 = scmp.ne.s32.totalorder %s80, %s81
      %p93 = scmp.eq.s32.totalorder %s29, 1
      %p94 = por %p92, %p93
      %p96 = scmp.ne.s32.totalorder %s81, %s95
      %p97 = scmp.eq.s32.totalorder %s29, 0
      %p98 = por %p96, %p97
      %s100 = sadd.s32 %s99, 1
      %p103 = scmp.eq.s32.totalorder %s23, 1
      %p104 = scmp.ne.s32.totalorder %s99, %s101
      %p105 = scmp.eq.s32.totalorder %s23, 0
      %p106 = por %p104, %p105
      %p107 = scmp.ne.s32.totalorder %s99, %s101
      %p108 = scmp.eq.s32.totalorder %s28, 1
      %p109 = por %p107, %p108
      %p110 = scmp.ne.s32.totalorder %s101, %s102
      %p111 = scmp.eq.s32.totalorder %s28, 0
      %p112 = por %p110, %p111
      %p113 = scmp.ne.s32.totalorder %s101, %s102
      %p114 = scmp.eq.s32.totalorder %s29, 1
      %p115 = por %p113, %p114
      %p117 = scmp.ne.s32.totalorder %s102, %s116
      %p118 = scmp.eq.s32.totalorder %s29, 0
      %p119 = por %p117, %p118
      %s121 = sadd.s32 %s120, 1
      %p124 = scmp.eq.s32.totalorder %s23, 1
      %p125 = scmp.ne.s32.totalorder %s120, %s122
      %p126 = scmp.eq.s32.totalorder %s23, 0
      %p127 = por %p125, %p126
      %p128 = scmp.ne.s32.totalorder %s120, %s122
      %p129 = scmp.eq.s32.totalorder %s28, 1
      %p130 = por %p128, %p129
      %p131 = scmp.ne.s32.totalorder %s122, %s123
      %p132 = scmp.eq.s32.totalorder %s28, 0
      %p133 = por %p131, %p132
      %p134 = scmp.ne.s32.totalorder %s122, %s123
      %p135 = scmp.eq.s32.totalorder %s29, 1
      %p136 = por %p134, %p135
      %p138 = scmp.ne.s32.totalorder %s123, %s137
      %p139 = scmp.eq.s32.totalorder %s29, 0
      %p140 = por %p138, %p139
      %s141 = ssub.s32 %s23, %s30
      %p142 = scmp.eq.s32.totalorder %s141, 0
      %s144 = sadd.s32 %s143, 1
      %s145 = scalar_select %p142, %s143, %s144
      %p148 = pneg %p142
      %p149 = scmp.eq.s32.totalorder %s23, 1
      %p150 = por %p148, %p149
      %p151 = scmp.ne.s32.totalorder %s143, %s146
      %p152 = scmp.eq.s32.totalorder %s23, 0
      %p153 = por %p151, %p152
      %p154 = scmp.ne.s32.totalorder %s143, %s146
      %p155 = scmp.eq.s32.totalorder %s28, 1
      %p156 = por %p154, %p155
      %p157 = scmp.ne.s32.totalorder %s146, %s147
      %p158 = scmp.eq.s32.totalorder %s28, 0
      %p159 = por %p157, %p158
      %p160 = scmp.ne.s32.totalorder %s146, %s147
      %p161 = scmp.eq.s32.totalorder %s29, 1
      %p162 = por %p160, %p161
      %p164 = scmp.ne.s32.totalorder %s147, %s163
      %p165 = scmp.eq.s32.totalorder %s29, 0
      %p166 = por %p164, %p165
      %s167 = ssub.s32 %s23, %s30
      %p168 = scmp.eq.s32.totalorder %s167, 0
      %s170 = sadd.s32 %s169, 1
      %s171 = scalar_select %p168, %s169, %s170
      %p174 = pneg %p168
      %p175 = scmp.eq.s32.totalorder %s23, 1
      %p176 = por %p174, %p175
      %p177 = scmp.ne.s32.totalorder %s169, %s172
      %p178 = scmp.eq.s32.totalorder %s23, 0
      %p179 = por %p177, %p178
      %p180 = scmp.ne.s32.totalorder %s169, %s172
      %p181 = scmp.eq.s32.totalorder %s28, 1
      %p182 = por %p180, %p181
      %p183 = scmp.ne.s32.totalorder %s172, %s173
      %p184 = scmp.eq.s32.totalorder %s28, 0
      %p185 = por %p183, %p184
      %p186 = scmp.ne.s32.totalorder %s172, %s173
      %p187 = scmp.eq.s32.totalorder %s29, 1
      %p188 = por %p186, %p187
      %p190 = scmp.ne.s32.totalorder %s173, %s189
      %p191 = scmp.eq.s32.totalorder %s29, 0
      %p192 = por %p190, %p191
      %p193 = scmp.le.s32.totalorder 1, %s23
      %p194 = scmp.lt.s32.totalorder %s23, 3
      %p195 = pnand %p193, %p194
      %p196 = pneg %p195
      // Predicated region
      $region9: #{tpu_custom_call.1} parent=5 // pred_check
        _
      $region10: #{tpu_custom_call.1} parent=5 // pred_check_branch
        %198 = sbr.rel (%p195) target = $region12
      $region11: #{tpu_custom_call.1} parent=5 // pred_region
        %s199 = ssub.s32 %s23, 1
        // Predicated region
        $region13: #{tpu_custom_call.1} parent=11 // pred_check
          %p200 = pneg %p70
        $region14: #{tpu_custom_call.1} parent=11 // pred_check_branch
          %202 = sbr.rel (%p200) target = $region16
        $region15: #{tpu_custom_call.1} parent=11 // pred_region
          %s204 = ssub.s32 512, 512
          %205 = vsyncadd [#allocation8], %s204
          %s206 = sshll.u32 [#allocation7], 4
          %s207 = int_to_ptr.vmem [resolvable:$true] %s206
          %212 = dma.hbm_to_vmem [thread:$0]  %s1, 512, %s207, [#allocation8], 128, 128, 8
        $region16: #{tpu_custom_call.1} parent=11 // pred_fallthru
          _
        // Predicated region
        $region17: #{tpu_custom_call.1} parent=11 // pred_check
          %p213 = pneg %p91
        $region18: #{tpu_custom_call.1} parent=11 // pred_check_branch
          %215 = sbr.rel (%p213) target = $region20
        $region19: #{tpu_custom_call.1} parent=11 // pred_region
          _
        $region20: #{tpu_custom_call.1} parent=11 // pred_fallthru
          _
        // Predicated region
        $region21: #{tpu_custom_call.1} parent=11 // pred_check
          %p216 = pneg %p112
        $region22: #{tpu_custom_call.1} parent=11 // pred_check_branch
          %218 = sbr.rel (%p216) target = $region24
        $region23: #{tpu_custom_call.1} parent=11 // pred_region
          %s220 = ssub.s32 512, 512
          %221 = vsyncadd [#allocation8], %s220
          %s222 = sshll.u32 [#allocation9], 4
          %s223 = int_to_ptr.vmem [resolvable:$true] %s222
          %228 = dma.hbm_to_vmem [thread:$0]  %s3, 512, %s223, [#allocation8], 128, 128, 8
        $region24: #{tpu_custom_call.1} parent=11 // pred_fallthru
          _
        // Predicated region
        $region25: #{tpu_custom_call.1} parent=11 // pred_check
          %p229 = pneg %p133
        $region26: #{tpu_custom_call.1} parent=11 // pred_check_branch
          %231 = sbr.rel (%p229) target = $region28
        $region27: #{tpu_custom_call.1} parent=11 // pred_region
          _
        $region28: #{tpu_custom_call.1} parent=11 // pred_fallthru
          _
      $region12: #{tpu_custom_call.1} parent=5 // pred_fallthru
        _
      %p232 = scmp.lt.s32.totalorder %s23, 2
      // Predicated region
      $region29: #{tpu_custom_call.1} parent=5 // pred_check
        %p233 = pneg %p232
      $region30: #{tpu_custom_call.1} parent=5 // pred_check_branch
        %235 = sbr.rel (%p233) target = $region32
      $region31: #{tpu_custom_call.1} parent=5 // pred_region
        // Predicated region
        $region33: #{tpu_custom_call.1} parent=31 // pred_check
          %p236 = pneg %p43
        $region34: #{tpu_custom_call.1} parent=31 // pred_check_branch
          %238 = sbr.rel (%p236) target = $region36
        $region35: #{tpu_custom_call.1} parent=31 // pred_region
          %s239 = sand.u32 %s33, 1
          %s240 = scalar_lea.sflag [#allocation5], %s239
          %s241 = sand.u32 %s33, 1
          %s242 = smul.addr %s241, 8
          %s243 = scalar_lea.vmem [#allocation4], %s242
          %s245 = ssub.s32 128, 128
          %246 = vsyncadd %s240, %s245
          %s247 = smul.addr %s23, 128
          %s248 = scalar_lea.hbm %s0, %s247
          %s250 = sshll.u32 %s243, 4
          %s251 = int_to_ptr.vmem [resolvable:$true] %s250
          %253 = dma.hbm_to_vmem [thread:$0]  %s248, 128, %s251, %s240
        $region36: #{tpu_custom_call.1} parent=31 // pred_fallthru
          _
      $region32: #{tpu_custom_call.1} parent=5 // pred_fallthru
        _
      %p254 = scmp.le.s32.totalorder 1, %s23
      %p255 = scmp.lt.s32.totalorder %s23, 3
      %p256 = pnand %p254, %p255
      %p257 = pneg %p256
      // Predicated region
      $region37: #{tpu_custom_call.1} parent=5 // pred_check
        _
      $region38: #{tpu_custom_call.1} parent=5 // pred_check_branch
        %259 = sbr.rel (%p256) target = $region40
      $region39: #{tpu_custom_call.1} parent=5 // pred_region
        %s260 = ssub.s32 %s23, 1
        %s261 = sand.u32 %s36, 1
        %s262 = scalar_lea.sflag [#allocation5], %s261
        %s263 = sand.u32 %s36, 1
        %s264 = smul.addr %s263, 8
        %s265 = scalar_lea.vmem [#allocation4], %s264
        // Predicated region
        $region41: #{tpu_custom_call.1} parent=39 // pred_check
          %p266 = pneg %p49
        $region42: #{tpu_custom_call.1} parent=39 // pred_check_branch
          %268 = sbr.rel (%p266) target = $region44
        $region43: #{tpu_custom_call.1} parent=39 // pred_region
          %269 = dma.done %s262, 128
        $region44: #{tpu_custom_call.1} parent=39 // pred_fallthru
          _
        // Predicated region
        $region45: #{tpu_custom_call.1} parent=39 // pred_check
          %p270 = pneg %p70
        $region46: #{tpu_custom_call.1} parent=39 // pred_check_branch
          %272 = sbr.rel (%p270) target = $region48
        $region47: #{tpu_custom_call.1} parent=39 // pred_region
          %273 = dma.done [#allocation8], 512
        $region48: #{tpu_custom_call.1} parent=39 // pred_fallthru
          _
        // Predicated region
        $region49: #{tpu_custom_call.1} parent=39 // pred_check
          %p274 = pneg %p112
        $region50: #{tpu_custom_call.1} parent=39 // pred_check_branch
          %276 = sbr.rel (%p274) target = $region52
        $region51: #{tpu_custom_call.1} parent=39 // pred_region
          %277 = dma.done [#allocation8], 512
        $region52: #{tpu_custom_call.1} parent=39 // pred_fallthru
          _
        %s278 = sand.u32 %s36, 1
        %s279 = scalar_lea.sflag [#allocation5], %s278
        %s280 = sand.u32 %s36, 1
        %s281 = smul.addr %s280, 8
        %s282 = scalar_lea.vmem [#allocation4], %s281
        %p283 = pneg %p49
        %p284 = pneg %p46
        %p285 = pneg %p70
        %p286 = pneg %p67
        %p287 = pneg %p91
        %p288 = pneg %p88
        %p289 = pneg %p112
        %p290 = pneg %p109
        %p291 = pneg %p133
        %p292 = pneg %p130
        %p293 = pneg %p159
        %p294 = pneg %p156
        %s295 = sand.u32 %s146, 1
        %s296 = scalar_lea.sflag [#allocation6], %s295
        %s297 = sand.u32 %s146, 1
        %s298 = smul.addr %s297, 8
        %s299 = scalar_lea.vmem [#allocation10], %s298
        %p300 = pneg %p185
        %p301 = pneg %p182
        %s302 = sand.u32 %s172, 1
        %s303 = scalar_lea.sflag [#allocation12], %s302
        %s304 = sand.u32 %s172, 1
        %s305 = smul.addr %s304, 32
        %s306 = scalar_lea.vmem [#allocation11], %s305
        %v307 = vld [vmem:[%s265] sm:$0xff]
        %v308 = vld [vmem:[#allocation7] sm:$0xff]
        %v309 = vld [vmem:[#allocation7 + $0x8] sm:$0xff]
        %v310 = vld [vmem:[#allocation7 + $0x10] sm:$0xff]
        %v311 = vld [vmem:[#allocation7 + $0x18] sm:$0xff]
        %v312 = vld [vmem:[%s2] sm:$0x1]
        %v314 = vlaneseq
        %v315 = vshrl.u32 %v314, 7
        %v316 = vsub.s32 0, %v315
        %v317 = vrot.slane %v312, %v316
        %vm319 = vcmask 261120
        %v321 = vsel %vm319, %v307, 0
        %323 = vmatprep.subr.mxu0 0.0
        %324 = vmatpush1.msra.mxu0 0.0
        %325 = vmatprep.subr.mxu0 0.0
        %326 = vmatpush1.msra.mxu0 0.0
        %327 = vmatprep.subr.mxu0 0.0
        %328 = vmatpush1.msra.mxu0 0.0
        %329 = vmatprep.subr.mxu0 0.0
        %330 = vmatpush1.msra.mxu0 0.0
        %331 = vmatprep.subr.mxu0 0.0
        %332 = vmatpush1.msra.mxu0 0.0
        %333 = vmatprep.subr.mxu0 0.0
        %334 = vmatpush1.msra.mxu0 0.0
        %335 = vmatprep.subr.mxu0 0.0
        %336 = vmatpush1.msra.mxu0 0.0
        %337 = vmatprep.subr.mxu0 0.0
        %338 = vmatpush1.msra.mxu0 0.0
        %339 = vmatprep.subr.mxu0 0.0
        %340 = vmatpush1.msra.mxu0 0.0
        %341 = vmatprep.subr.mxu0 0.0
        %342 = vmatpush1.msra.mxu0 0.0
        %343 = vmatprep.subr.mxu0 0.0
        %344 = vmatpush1.msra.mxu0 0.0
        %345 = vmatprep.subr.mxu0 0.0
        %346 = vmatpush1.msra.mxu0 0.0
        %347 = vmatprep.subr.mxu0 0.0
        %348 = vmatpush1.msra.mxu0 %v311
        %349 = vmatprep.subr.mxu0 0.0
        %350 = vmatpush1.msra.mxu0 %v310
        %351 = vmatprep.subr.mxu0 0.0
        %352 = vmatpush1.msra.mxu0 %v309
        %353 = vmatprep.subr.mxu0 0.0
        %354 = vmatpush1.msra.mxu0 %v308
        %355 = vmatprep.subr.mxu0 0.0
        %356 = vmatpush2.msra.mxu0 0.0
        %357 = vmatprep.subr.mxu0 0.0
        %358 = vmatpush2.msra.mxu0 0.0
        %359 = vmatprep.subr.mxu0 0.0
        %360 = vmatpush2.msra.mxu0 0.0
        %361 = vmatprep.subr.mxu0 0.0
        %362 = vmatpush2.msra.mxu0 0.0
        %363 = vmatprep.subr.mxu0 0.0
        %364 = vmatpush2.msra.mxu0 0.0
        %365 = vmatprep.subr.mxu0 0.0
        %366 = vmatpush2.msra.mxu0 0.0
        %367 = vmatprep.subr.mxu0 0.0
        %368 = vmatpush2.msra.mxu0 0.0
        %369 = vmatprep.subr.mxu0 0.0
        %370 = vmatpush2.msra.mxu0 0.0
        %371 = vmatprep.subr.mxu0 0.0
        %372 = vmatpush2.msra.mxu0 0.0
        %373 = vmatprep.subr.mxu0 0.0
        %374 = vmatpush2.msra.mxu0 0.0
        %375 = vmatprep.subr.mxu0 0.0
        %376 = vmatpush2.msra.mxu0 0.0
        %377 = vmatprep.subr.mxu0 0.0
        %378 = vmatpush2.msra.mxu0 0.0
        %379 = vmatprep.subr.mxu0 0.0
        %380 = vmatpush2.msra.mxu0 0.0
        %381 = vmatprep.subr.mxu0 0.0
        %382 = vmatpush2.msra.mxu0 0.0
        %383 = vmatprep.subr.mxu0 0.0
        %384 = vmatpush2.msra.mxu0 0.0
        %385 = vmatprep.subr.mxu0 0.0
        %386 = vmatpush2.msra.mxu0 0.0
        %387 = vmatprep.mubr.f32.mxu0 0.0
        %388 = vmatmul.mubr.f32.gmra.mxu0 %v321
        %v389 = vpop.f32.mrf.mxu0
        %v390 = vadd.f32 %v317, %v389
        %v391 = vpop.f32.mrf.mxu0
        %392 = vdwg.mxu0
        %vm393 = vcmask 785408
        %394 = vst.msk [vmem:[#allocation2] sm:$0xff] %vm393, %v390
        %v395 = vld [vmem:[#allocation2] sm:$0xff]
        %397 = vrot.lane.b32.xlu0 %v395, 96
        %v398 = vpop.permute.xlu0 %397
        %vm399 = vcmask 64512
        %v400 = vsel %vm399, %v395, 0
        %v402 = vsel %vm399, %v398, 0
        %404 = vmatprep.subr.mxu0 0.0
        %405 = vmatpush1.xpose.msra.mxu0 0.0
        %406 = vmatprep.subr.mxu0 0.0
        %407 = vmatpush1.xpose.msra.mxu0 0.0
        %408 = vmatprep.subr.mxu0 0.0
        %409 = vmatpush1.xpose.msra.mxu0 0.0
        %410 = vmatprep.subr.mxu0 0.0
        %411 = vmatpush1.xpose.msra.mxu0 0.0
        %412 = vmatprep.subr.mxu0 0.0
        %413 = vmatpush1.xpose.msra.mxu0 0.0
        %414 = vmatprep.subr.mxu0 0.0
        %415 = vmatpush1.xpose.msra.mxu0 0.0
        %416 = vmatprep.subr.mxu0 0.0
        %417 = vmatpush1.xpose.msra.mxu0 0.0
        %418 = vmatprep.subr.mxu0 0.0
        %419 = vmatpush1.xpose.msra.mxu0 0.0
        %420 = vmatprep.subr.mxu0 0.0
        %421 = vmatpush1.xpose.msra.mxu0 0.0
        %422 = vmatprep.subr.mxu0 0.0
        %423 = vmatpush1.xpose.msra.mxu0 0.0
        %424 = vmatprep.subr.mxu0 0.0
        %425 = vmatpush1.xpose.msra.mxu0 0.0
        %426 = vmatprep.subr.mxu0 0.0
        %427 = vmatpush1.xpose.msra.mxu0 0.0
        %428 = vmatprep.subr.mxu0 0.0
        %429 = vmatpush1.xpose.msra.mxu0 0.0
        %430 = vmatprep.subr.mxu0 0.0
        %431 = vmatpush1.xpose.msra.mxu0 0.0
        %432 = vmatprep.subr.mxu0 0.0
        %433 = vmatpush1.xpose.msra.mxu0 0.0
        %434 = vmatprep.subr.mxu0 0.0
        %435 = vmatpush1.xpose.msra.mxu0 %v402
        %436 = vmatprep.subr.mxu0 0.0
        %437 = vmatpush2.xpose.msra.mxu0 0.0
        %438 = vmatprep.subr.mxu0 0.0
        %439 = vmatpush2.xpose.msra.mxu0 0.0
        %440 = vmatprep.subr.mxu0 0.0
        %441 = vmatpush2.xpose.msra.mxu0 0.0
        %442 = vmatprep.subr.mxu0 0.0
        %443 = vmatpush2.xpose.msra.mxu0 0.0
        %444 = vmatprep.subr.mxu0 0.0
        %445 = vmatpush2.xpose.msra.mxu0 0.0
        %446 = vmatprep.subr.mxu0 0.0
        %447 = vmatpush2.xpose.msra.mxu0 0.0
        %448 = vmatprep.subr.mxu0 0.0
        %449 = vmatpush2.xpose.msra.mxu0 0.0
        %450 = vmatprep.subr.mxu0 0.0
        %451 = vmatpush2.xpose.msra.mxu0 0.0
        %452 = vmatprep.subr.mxu0 0.0
        %453 = vmatpush2.xpose.msra.mxu0 0.0
        %454 = vmatprep.subr.mxu0 0.0
        %455 = vmatpush2.xpose.msra.mxu0 0.0
        %456 = vmatprep.subr.mxu0 0.0
        %457 = vmatpush2.xpose.msra.mxu0 0.0
        %458 = vmatprep.subr.mxu0 0.0
        %459 = vmatpush2.xpose.msra.mxu0 0.0
        %460 = vmatprep.subr.mxu0 0.0
        %461 = vmatpush2.xpose.msra.mxu0 0.0
        %462 = vmatprep.subr.mxu0 0.0
        %463 = vmatpush2.xpose.msra.mxu0 0.0
        %464 = vmatprep.subr.mxu0 0.0
        %465 = vmatpush2.xpose.msra.mxu0 0.0
        %466 = vmatprep.subr.mxu0 0.0
        %467 = vmatpush2.xpose.msra.mxu0 0.0
        %468 = vmatprep.mubr.f32.mxu0 0.0
        %469 = vmatmul.mubr.f32.gmra.mxu0 %v400
        %v470 = vpop.f32.mrf.mxu0
        %v471 = vadd.f32 0.0, %v470
        %v472 = vpop.f32.mrf.mxu0
        %473 = vdwg.mxu0
        %v474 = vsel %vm399, %v471, -inf
        %475 = vmax.xlane.f32.xlu0 %v474
        %v476 = vpop.xlane.xlu0 %475
        %v477 = vsub.f32 %v471, %v476
        %v478 = vmul.f32 %v477, 1.442695
        %v479 = vpow.pop %v478
        %v480 = vsel %vm399, %v479, 0.0
        %481 = vadd.xlane.f32.xlu0 %v480
        %v482 = vpop.xlane.xlu0 %481
        %v483 = vrcp.pop %v482
        %v484 = vmul.f32 %v479, %v483
        %485 = vst.msk [vmem:[%s306] sm:$0xff] %vm399, %v484
        %486 = vrot.lane.b32.xlu0 %v395, 64
        %v487 = vpop.permute.xlu0 %486
        %v490 = vsel %vm399, %v484, 0
        %492 = vmatprep.subr.mxu0 0.0
        %493 = vmatpush1.msra.mxu0 0.0
        %494 = vmatprep.subr.mxu0 0.0
        %495 = vmatpush1.msra.mxu0 0.0
        %496 = vmatprep.subr.mxu0 0.0
        %497 = vmatpush1.msra.mxu0 0.0
        %498 = vmatprep.subr.mxu0 0.0
        %499 = vmatpush1.msra.mxu0 0.0
        %500 = vmatprep.subr.mxu0 0.0
        %501 = vmatpush1.msra.mxu0 0.0
        %502 = vmatprep.subr.mxu0 0.0
        %503 = vmatpush1.msra.mxu0 0.0
        %504 = vmatprep.subr.mxu0 0.0
        %505 = vmatpush1.msra.mxu0 0.0
        %506 = vmatprep.subr.mxu0 0.0
        %507 = vmatpush1.msra.mxu0 0.0
        %508 = vmatprep.subr.mxu0 0.0
        %509 = vmatpush1.msra.mxu0 0.0
        %510 = vmatprep.subr.mxu0 0.0
        %511 = vmatpush1.msra.mxu0 0.0
        %512 = vmatprep.subr.mxu0 0.0
        %513 = vmatpush1.msra.mxu0 0.0
        %514 = vmatprep.subr.mxu0 0.0
        %515 = vmatpush1.msra.mxu0 0.0
        %516 = vmatprep.subr.mxu0 0.0
        %517 = vmatpush1.msra.mxu0 0.0
        %518 = vmatprep.subr.mxu0 0.0
        %519 = vmatpush1.msra.mxu0 0.0
        %520 = vmatprep.subr.mxu0 0.0
        %521 = vmatpush1.msra.mxu0 0.0
        %522 = vmatprep.subr.mxu0 0.0
        %523 = vmatpush1.msra.mxu0 %v487
        %524 = vmatprep.subr.mxu0 0.0
        %525 = vmatpush2.msra.mxu0 0.0
        %526 = vmatprep.subr.mxu0 0.0
        %527 = vmatpush2.msra.mxu0 0.0
        %528 = vmatprep.subr.mxu0 0.0
        %529 = vmatpush2.msra.mxu0 0.0
        %530 = vmatprep.subr.mxu0 0.0
        %531 = vmatpush2.msra.mxu0 0.0
        %532 = vmatprep.subr.mxu0 0.0
        %533 = vmatpush2.msra.mxu0 0.0
        %534 = vmatprep.subr.mxu0 0.0
        %535 = vmatpush2.msra.mxu0 0.0
        %536 = vmatprep.subr.mxu0 0.0
        %537 = vmatpush2.msra.mxu0 0.0
        %538 = vmatprep.subr.mxu0 0.0
        %539 = vmatpush2.msra.mxu0 0.0
        %540 = vmatprep.subr.mxu0 0.0
        %541 = vmatpush2.msra.mxu0 0.0
        %542 = vmatprep.subr.mxu0 0.0
        %543 = vmatpush2.msra.mxu0 0.0
        %544 = vmatprep.subr.mxu0 0.0
        %545 = vmatpush2.msra.mxu0 0.0
        %546 = vmatprep.subr.mxu0 0.0
        %547 = vmatpush2.msra.mxu0 0.0
        %548 = vmatprep.subr.mxu0 0.0
        %549 = vmatpush2.msra.mxu0 0.0
        %550 = vmatprep.subr.mxu0 0.0
        %551 = vmatpush2.msra.mxu0 0.0
        %552 = vmatprep.subr.mxu0 0.0
        %553 = vmatpush2.msra.mxu0 0.0
        %554 = vmatprep.subr.mxu0 0.0
        %555 = vmatpush2.msra.mxu0 0.0
        %556 = vmatprep.mubr.f32.mxu0 0.0
        %557 = vmatmul.mubr.f32.gmra.mxu0 %v490
        %v558 = vpop.f32.mrf.mxu0
        %v559 = vadd.f32 0.0, %v558
        %v560 = vpop.f32.mrf.mxu0
        %561 = vdwg.mxu0
        %562 = vst.msk [vmem:[#allocation3] sm:$0xff] %vm399, %v559
        %v563 = vld [vmem:[#allocation2] sm:$0xff]
        %565 = vrot.lane.b32.xlu0 %v563, 120
        %v566 = vpop.permute.xlu0 %565
        %567 = vrot.lane.b32.xlu0 %v563, 88
        %v568 = vpop.permute.xlu0 %567
        %v569 = vsel %vm399, %v566, 0
        %v571 = vsel %vm399, %v568, 0
        %573 = vmatprep.subr.mxu0 0.0
        %574 = vmatpush1.xpose.msra.mxu0 0.0
        %575 = vmatprep.subr.mxu0 0.0
        %576 = vmatpush1.xpose.msra.mxu0 0.0
        %577 = vmatprep.subr.mxu0 0.0
        %578 = vmatpush1.xpose.msra.mxu0 0.0
        %579 = vmatprep.subr.mxu0 0.0
        %580 = vmatpush1.xpose.msra.mxu0 0.0
        %581 = vmatprep.subr.mxu0 0.0
        %582 = vmatpush1.xpose.msra.mxu0 0.0
        %583 = vmatprep.subr.mxu0 0.0
        %584 = vmatpush1.xpose.msra.mxu0 0.0
        %585 = vmatprep.subr.mxu0 0.0
        %586 = vmatpush1.xpose.msra.mxu0 0.0
        %587 = vmatprep.subr.mxu0 0.0
        %588 = vmatpush1.xpose.msra.mxu0 0.0
        %589 = vmatprep.subr.mxu0 0.0
        %590 = vmatpush1.xpose.msra.mxu0 0.0
        %591 = vmatprep.subr.mxu0 0.0
        %592 = vmatpush1.xpose.msra.mxu0 0.0
        %593 = vmatprep.subr.mxu0 0.0
        %594 = vmatpush1.xpose.msra.mxu0 0.0
        %595 = vmatprep.subr.mxu0 0.0
        %596 = vmatpush1.xpose.msra.mxu0 0.0
        %597 = vmatprep.subr.mxu0 0.0
        %598 = vmatpush1.xpose.msra.mxu0 0.0
        %599 = vmatprep.subr.mxu0 0.0
        %600 = vmatpush1.xpose.msra.mxu0 0.0
        %601 = vmatprep.subr.mxu0 0.0
        %602 = vmatpush1.xpose.msra.mxu0 0.0
        %603 = vmatprep.subr.mxu0 0.0
        %604 = vmatpush1.xpose.msra.mxu0 %v571
        %605 = vmatprep.subr.mxu0 0.0
        %606 = vmatpush2.xpose.msra.mxu0 0.0
        %607 = vmatprep.subr.mxu0 0.0
        %608 = vmatpush2.xpose.msra.mxu0 0.0
        %609 = vmatprep.subr.mxu0 0.0
        %610 = vmatpush2.xpose.msra.mxu0 0.0
        %611 = vmatprep.subr.mxu0 0.0
        %612 = vmatpush2.xpose.msra.mxu0 0.0
        %613 = vmatprep.subr.mxu0 0.0
        %614 = vmatpush2.xpose.msra.mxu0 0.0
        %615 = vmatprep.subr.mxu0 0.0
        %616 = vmatpush2.xpose.msra.mxu0 0.0
        %617 = vmatprep.subr.mxu0 0.0
        %618 = vmatpush2.xpose.msra.mxu0 0.0
        %619 = vmatprep.subr.mxu0 0.0
        %620 = vmatpush2.xpose.msra.mxu0 0.0
        %621 = vmatprep.subr.mxu0 0.0
        %622 = vmatpush2.xpose.msra.mxu0 0.0
        %623 = vmatprep.subr.mxu0 0.0
        %624 = vmatpush2.xpose.msra.mxu0 0.0
        %625 = vmatprep.subr.mxu0 0.0
        %626 = vmatpush2.xpose.msra.mxu0 0.0
        %627 = vmatprep.subr.mxu0 0.0
        %628 = vmatpush2.xpose.msra.mxu0 0.0
        %629 = vmatprep.subr.mxu0 0.0
        %630 = vmatpush2.xpose.msra.mxu0 0.0
        %631 = vmatprep.subr.mxu0 0.0
        %632 = vmatpush2.xpose.msra.mxu0 0.0
        %633 = vmatprep.subr.mxu0 0.0
        %634 = vmatpush2.xpose.msra.mxu0 0.0
        %635 = vmatprep.subr.mxu0 0.0
        %636 = vmatpush2.xpose.msra.mxu0 0.0
        %637 = vmatprep.mubr.f32.mxu0 0.0
        %638 = vmatmul.mubr.f32.gmra.mxu0 %v569
        %v639 = vpop.f32.mrf.mxu0
        %v640 = vadd.f32 0.0, %v639
        %v641 = vpop.f32.mrf.mxu0
        %642 = vdwg.mxu0
        %v643 = vsel %vm399, %v640, -inf
        %644 = vmax.xlane.f32.xlu0 %v643
        %v645 = vpop.xlane.xlu0 %644
        %v646 = vsub.f32 %v640, %v645
        %v647 = vmul.f32 %v646, 1.442695
        %v648 = vpow.pop %v647
        %v649 = vsel %vm399, %v648, 0.0
        %650 = vadd.xlane.f32.xlu0 %v649
        %v651 = vpop.xlane.xlu0 %650
        %v652 = vrcp.pop %v651
        %v653 = vmul.f32 %v648, %v652
        %s654 = scalar_lea.vmem %s306, 8 [#allocation11]
        %655 = vst.msk [vmem:[%s654] sm:$0xff] %vm399, %v653
        %656 = vrot.lane.b32.xlu0 %v563, 56
        %v657 = vpop.permute.xlu0 %656
        %v660 = vsel %vm399, %v653, 0
        %662 = vmatprep.subr.mxu0 0.0
        %663 = vmatpush1.msra.mxu0 0.0
        %664 = vmatprep.subr.mxu0 0.0
        %665 = vmatpush1.msra.mxu0 0.0
        %666 = vmatprep.subr.mxu0 0.0
        %667 = vmatpush1.msra.mxu0 0.0
        %668 = vmatprep.subr.mxu0 0.0
        %669 = vmatpush1.msra.mxu0 0.0
        %670 = vmatprep.subr.mxu0 0.0
        %671 = vmatpush1.msra.mxu0 0.0
        %672 = vmatprep.subr.mxu0 0.0
        %673 = vmatpush1.msra.mxu0 0.0
        %674 = vmatprep.subr.mxu0 0.0
        %675 = vmatpush1.msra.mxu0 0.0
        %676 = vmatprep.subr.mxu0 0.0
        %677 = vmatpush1.msra.mxu0 0.0
        %678 = vmatprep.subr.mxu0 0.0
        %679 = vmatpush1.msra.mxu0 0.0
        %680 = vmatprep.subr.mxu0 0.0
        %681 = vmatpush1.msra.mxu0 0.0
        %682 = vmatprep.subr.mxu0 0.0
        %683 = vmatpush1.msra.mxu0 0.0
        %684 = vmatprep.subr.mxu0 0.0
        %685 = vmatpush1.msra.mxu0 0.0
        %686 = vmatprep.subr.mxu0 0.0
        %687 = vmatpush1.msra.mxu0 0.0
        %688 = vmatprep.subr.mxu0 0.0
        %689 = vmatpush1.msra.mxu0 0.0
        %690 = vmatprep.subr.mxu0 0.0
        %691 = vmatpush1.msra.mxu0 0.0
        %692 = vmatprep.subr.mxu0 0.0
        %693 = vmatpush1.msra.mxu0 %v657
        %694 = vmatprep.subr.mxu0 0.0
        %695 = vmatpush2.msra.mxu0 0.0
        %696 = vmatprep.subr.mxu0 0.0
        %697 = vmatpush2.msra.mxu0 0.0
        %698 = vmatprep.subr.mxu0 0.0
        %699 = vmatpush2.msra.mxu0 0.0
        %700 = vmatprep.subr.mxu0 0.0
        %701 = vmatpush2.msra.mxu0 0.0
        %702 = vmatprep.subr.mxu0 0.0
        %703 = vmatpush2.msra.mxu0 0.0
        %704 = vmatprep.subr.mxu0 0.0
        %705 = vmatpush2.msra.mxu0 0.0
        %706 = vmatprep.subr.mxu0 0.0
        %707 = vmatpush2.msra.mxu0 0.0
        %708 = vmatprep.subr.mxu0 0.0
        %709 = vmatpush2.msra.mxu0 0.0
        %710 = vmatprep.subr.mxu0 0.0
        %711 = vmatpush2.msra.mxu0 0.0
        %712 = vmatprep.subr.mxu0 0.0
        %713 = vmatpush2.msra.mxu0 0.0
        %714 = vmatprep.subr.mxu0 0.0
        %715 = vmatpush2.msra.mxu0 0.0
        %716 = vmatprep.subr.mxu0 0.0
        %717 = vmatpush2.msra.mxu0 0.0
        %718 = vmatprep.subr.mxu0 0.0
        %719 = vmatpush2.msra.mxu0 0.0
        %720 = vmatprep.subr.mxu0 0.0
        %721 = vmatpush2.msra.mxu0 0.0
        %722 = vmatprep.subr.mxu0 0.0
        %723 = vmatpush2.msra.mxu0 0.0
        %724 = vmatprep.subr.mxu0 0.0
        %725 = vmatpush2.msra.mxu0 0.0
        %726 = vmatprep.mubr.f32.mxu0 0.0
        %727 = vmatmul.mubr.f32.gmra.mxu0 %v660
        %v728 = vpop.f32.mrf.mxu0
        %v729 = vadd.f32 0.0, %v728
        %v730 = vpop.f32.mrf.mxu0
        %731 = vdwg.mxu0
        %733 = vrot.lane.b32.xlu0 %v729, 8
        %v734 = vpop.permute.xlu0 %733
        %vm736 = vcmask 130112
        %737 = vst.msk [vmem:[#allocation3] sm:$0xff] %vm736, %v734
        %v738 = vld [vmem:[#allocation2] sm:$0xff]
        %740 = vrot.lane.b32.xlu0 %v738, 112
        %v741 = vpop.permute.xlu0 %740
        %742 = vrot.lane.b32.xlu0 %v738, 80
        %v743 = vpop.permute.xlu0 %742
        %v744 = vsel %vm399, %v741, 0
        %v746 = vsel %vm399, %v743, 0
        %748 = vmatprep.subr.mxu0 0.0
        %749 = vmatpush1.xpose.msra.mxu0 0.0
        %750 = vmatprep.subr.mxu0 0.0
        %751 = vmatpush1.xpose.msra.mxu0 0.0
        %752 = vmatprep.subr.mxu0 0.0
        %753 = vmatpush1.xpose.msra.mxu0 0.0
        %754 = vmatprep.subr.mxu0 0.0
        %755 = vmatpush1.xpose.msra.mxu0 0.0
        %756 = vmatprep.subr.mxu0 0.0
        %757 = vmatpush1.xpose.msra.mxu0 0.0
        %758 = vmatprep.subr.mxu0 0.0
        %759 = vmatpush1.xpose.msra.mxu0 0.0
        %760 = vmatprep.subr.mxu0 0.0
        %761 = vmatpush1.xpose.msra.mxu0 0.0
        %762 = vmatprep.subr.mxu0 0.0
        %763 = vmatpush1.xpose.msra.mxu0 0.0
        %764 = vmatprep.subr.mxu0 0.0
        %765 = vmatpush1.xpose.msra.mxu0 0.0
        %766 = vmatprep.subr.mxu0 0.0
        %767 = vmatpush1.xpose.msra.mxu0 0.0
        %768 = vmatprep.subr.mxu0 0.0
        %769 = vmatpush1.xpose.msra.mxu0 0.0
        %770 = vmatprep.subr.mxu0 0.0
        %771 = vmatpush1.xpose.msra.mxu0 0.0
        %772 = vmatprep.subr.mxu0 0.0
        %773 = vmatpush1.xpose.msra.mxu0 0.0
        %774 = vmatprep.subr.mxu0 0.0
        %775 = vmatpush1.xpose.msra.mxu0 0.0
        %776 = vmatprep.subr.mxu0 0.0
        %777 = vmatpush1.xpose.msra.mxu0 0.0
        %778 = vmatprep.subr.mxu0 0.0
        %779 = vmatpush1.xpose.msra.mxu0 %v746
        %780 = vmatprep.subr.mxu0 0.0
        %781 = vmatpush2.xpose.msra.mxu0 0.0
        %782 = vmatprep.subr.mxu0 0.0
        %783 = vmatpush2.xpose.msra.mxu0 0.0
        %784 = vmatprep.subr.mxu0 0.0
        %785 = vmatpush2.xpose.msra.mxu0 0.0
        %786 = vmatprep.subr.mxu0 0.0
        %787 = vmatpush2.xpose.msra.mxu0 0.0
        %788 = vmatprep.subr.mxu0 0.0
        %789 = vmatpush2.xpose.msra.mxu0 0.0
        %790 = vmatprep.subr.mxu0 0.0
        %791 = vmatpush2.xpose.msra.mxu0 0.0
        %792 = vmatprep.subr.mxu0 0.0
        %793 = vmatpush2.xpose.msra.mxu0 0.0
        %794 = vmatprep.subr.mxu0 0.0
        %795 = vmatpush2.xpose.msra.mxu0 0.0
        %796 = vmatprep.subr.mxu0 0.0
        %797 = vmatpush2.xpose.msra.mxu0 0.0
        %798 = vmatprep.subr.mxu0 0.0
        %799 = vmatpush2.xpose.msra.mxu0 0.0
        %800 = vmatprep.subr.mxu0 0.0
        %801 = vmatpush2.xpose.msra.mxu0 0.0
        %802 = vmatprep.subr.mxu0 0.0
        %803 = vmatpush2.xpose.msra.mxu0 0.0
        %804 = vmatprep.subr.mxu0 0.0
        %805 = vmatpush2.xpose.msra.mxu0 0.0
        %806 = vmatprep.subr.mxu0 0.0
        %807 = vmatpush2.xpose.msra.mxu0 0.0
        %808 = vmatprep.subr.mxu0 0.0
        %809 = vmatpush2.xpose.msra.mxu0 0.0
        %810 = vmatprep.subr.mxu0 0.0
        %811 = vmatpush2.xpose.msra.mxu0 0.0
        %812 = vmatprep.mubr.f32.mxu0 0.0
        %813 = vmatmul.mubr.f32.gmra.mxu0 %v744
        %v814 = vpop.f32.mrf.mxu0
        %v815 = vadd.f32 0.0, %v814
        %v816 = vpop.f32.mrf.mxu0
        %817 = vdwg.mxu0
        %v818 = vsel %vm399, %v815, -inf
        %819 = vmax.xlane.f32.xlu0 %v818
        %v820 = vpop.xlane.xlu0 %819
        %v821 = vsub.f32 %v815, %v820
        %v822 = vmul.f32 %v821, 1.442695
        %v823 = vpow.pop %v822
        %v824 = vsel %vm399, %v823, 0.0
        %825 = vadd.xlane.f32.xlu0 %v824
        %v826 = vpop.xlane.xlu0 %825
        %v827 = vrcp.pop %v826
        %v828 = vmul.f32 %v823, %v827
        %s829 = scalar_lea.vmem %s306, 16 [#allocation11]
        %830 = vst.msk [vmem:[%s829] sm:$0xff] %vm399, %v828
        %831 = vrot.lane.b32.xlu0 %v738, 48
        %v832 = vpop.permute.xlu0 %831
        %v835 = vsel %vm399, %v828, 0
        %837 = vmatprep.subr.mxu0 0.0
        %838 = vmatpush1.msra.mxu0 0.0
        %839 = vmatprep.subr.mxu0 0.0
        %840 = vmatpush1.msra.mxu0 0.0
        %841 = vmatprep.subr.mxu0 0.0
        %842 = vmatpush1.msra.mxu0 0.0
        %843 = vmatprep.subr.mxu0 0.0
        %844 = vmatpush1.msra.mxu0 0.0
        %845 = vmatprep.subr.mxu0 0.0
        %846 = vmatpush1.msra.mxu0 0.0
        %847 = vmatprep.subr.mxu0 0.0
        %848 = vmatpush1.msra.mxu0 0.0
        %849 = vmatprep.subr.mxu0 0.0
        %850 = vmatpush1.msra.mxu0 0.0
        %851 = vmatprep.subr.mxu0 0.0
        %852 = vmatpush1.msra.mxu0 0.0
        %853 = vmatprep.subr.mxu0 0.0
        %854 = vmatpush1.msra.mxu0 0.0
        %855 = vmatprep.subr.mxu0 0.0
        %856 = vmatpush1.msra.mxu0 0.0
        %857 = vmatprep.subr.mxu0 0.0
        %858 = vmatpush1.msra.mxu0 0.0
        %859 = vmatprep.subr.mxu0 0.0
        %860 = vmatpush1.msra.mxu0 0.0
        %861 = vmatprep.subr.mxu0 0.0
        %862 = vmatpush1.msra.mxu0 0.0
        %863 = vmatprep.subr.mxu0 0.0
        %864 = vmatpush1.msra.mxu0 0.0
        %865 = vmatprep.subr.mxu0 0.0
        %866 = vmatpush1.msra.mxu0 0.0
        %867 = vmatprep.subr.mxu0 0.0
        %868 = vmatpush1.msra.mxu0 %v832
        %869 = vmatprep.subr.mxu0 0.0
        %870 = vmatpush2.msra.mxu0 0.0
        %871 = vmatprep.subr.mxu0 0.0
        %872 = vmatpush2.msra.mxu0 0.0
        %873 = vmatprep.subr.mxu0 0.0
        %874 = vmatpush2.msra.mxu0 0.0
        %875 = vmatprep.subr.mxu0 0.0
        %876 = vmatpush2.msra.mxu0 0.0
        %877 = vmatprep.subr.mxu0 0.0
        %878 = vmatpush2.msra.mxu0 0.0
        %879 = vmatprep.subr.mxu0 0.0
        %880 = vmatpush2.msra.mxu0 0.0
        %881 = vmatprep.subr.mxu0 0.0
        %882 = vmatpush2.msra.mxu0 0.0
        %883 = vmatprep.subr.mxu0 0.0
        %884 = vmatpush2.msra.mxu0 0.0
        %885 = vmatprep.subr.mxu0 0.0
        %886 = vmatpush2.msra.mxu0 0.0
        %887 = vmatprep.subr.mxu0 0.0
        %888 = vmatpush2.msra.mxu0 0.0
        %889 = vmatprep.subr.mxu0 0.0
        %890 = vmatpush2.msra.mxu0 0.0
        %891 = vmatprep.subr.mxu0 0.0
        %892 = vmatpush2.msra.mxu0 0.0
        %893 = vmatprep.subr.mxu0 0.0
        %894 = vmatpush2.msra.mxu0 0.0
        %895 = vmatprep.subr.mxu0 0.0
        %896 = vmatpush2.msra.mxu0 0.0
        %897 = vmatprep.subr.mxu0 0.0
        %898 = vmatpush2.msra.mxu0 0.0
        %899 = vmatprep.subr.mxu0 0.0
        %900 = vmatpush2.msra.mxu0 0.0
        %901 = vmatprep.mubr.f32.mxu0 0.0
        %902 = vmatmul.mubr.f32.gmra.mxu0 %v835
        %v903 = vpop.f32.mrf.mxu0
        %v904 = vadd.f32 0.0, %v903
        %v905 = vpop.f32.mrf.mxu0
        %906 = vdwg.mxu0
        %908 = vrot.lane.b32.xlu0 %v904, 16
        %v909 = vpop.permute.xlu0 %908
        %vm911 = vcmask 195712
        %912 = vst.msk [vmem:[#allocation3] sm:$0xff] %vm911, %v909
        %v913 = vld [vmem:[#allocation2] sm:$0xff]
        %915 = vrot.lane.b32.xlu0 %v913, 104
        %v916 = vpop.permute.xlu0 %915
        %917 = vrot.lane.b32.xlu0 %v913, 72
        %v918 = vpop.permute.xlu0 %917
        %v919 = vsel %vm399, %v916, 0
        %v921 = vsel %vm399, %v918, 0
        %923 = vmatprep.subr.mxu0 0.0
        %924 = vmatpush1.xpose.msra.mxu0 0.0
        %925 = vmatprep.subr.mxu0 0.0
        %926 = vmatpush1.xpose.msra.mxu0 0.0
        %927 = vmatprep.subr.mxu0 0.0
        %928 = vmatpush1.xpose.msra.mxu0 0.0
        %929 = vmatprep.subr.mxu0 0.0
        %930 = vmatpush1.xpose.msra.mxu0 0.0
        %931 = vmatprep.subr.mxu0 0.0
        %932 = vmatpush1.xpose.msra.mxu0 0.0
        %933 = vmatprep.subr.mxu0 0.0
        %934 = vmatpush1.xpose.msra.mxu0 0.0
        %935 = vmatprep.subr.mxu0 0.0
        %936 = vmatpush1.xpose.msra.mxu0 0.0
        %937 = vmatprep.subr.mxu0 0.0
        %938 = vmatpush1.xpose.msra.mxu0 0.0
        %939 = vmatprep.subr.mxu0 0.0
        %940 = vmatpush1.xpose.msra.mxu0 0.0
        %941 = vmatprep.subr.mxu0 0.0
        %942 = vmatpush1.xpose.msra.mxu0 0.0
        %943 = vmatprep.subr.mxu0 0.0
        %944 = vmatpush1.xpose.msra.mxu0 0.0
        %945 = vmatprep.subr.mxu0 0.0
        %946 = vmatpush1.xpose.msra.mxu0 0.0
        %947 = vmatprep.subr.mxu0 0.0
        %948 = vmatpush1.xpose.msra.mxu0 0.0
        %949 = vmatprep.subr.mxu0 0.0
        %950 = vmatpush1.xpose.msra.mxu0 0.0
        %951 = vmatprep.subr.mxu0 0.0
        %952 = vmatpush1.xpose.msra.mxu0 0.0
        %953 = vmatprep.subr.mxu0 0.0
        %954 = vmatpush1.xpose.msra.mxu0 %v921
        %955 = vmatprep.subr.mxu0 0.0
        %956 = vmatpush2.xpose.msra.mxu0 0.0
        %957 = vmatprep.subr.mxu0 0.0
        %958 = vmatpush2.xpose.msra.mxu0 0.0
        %959 = vmatprep.subr.mxu0 0.0
        %960 = vmatpush2.xpose.msra.mxu0 0.0
        %961 = vmatprep.subr.mxu0 0.0
        %962 = vmatpush2.xpose.msra.mxu0 0.0
        %963 = vmatprep.subr.mxu0 0.0
        %964 = vmatpush2.xpose.msra.mxu0 0.0
        %965 = vmatprep.subr.mxu0 0.0
        %966 = vmatpush2.xpose.msra.mxu0 0.0
        %967 = vmatprep.subr.mxu0 0.0
        %968 = vmatpush2.xpose.msra.mxu0 0.0
        %969 = vmatprep.subr.mxu0 0.0
        %970 = vmatpush2.xpose.msra.mxu0 0.0
        %971 = vmatprep.subr.mxu0 0.0
        %972 = vmatpush2.xpose.msra.mxu0 0.0
        %973 = vmatprep.subr.mxu0 0.0
        %974 = vmatpush2.xpose.msra.mxu0 0.0
        %975 = vmatprep.subr.mxu0 0.0
        %976 = vmatpush2.xpose.msra.mxu0 0.0
        %977 = vmatprep.subr.mxu0 0.0
        %978 = vmatpush2.xpose.msra.mxu0 0.0
        %979 = vmatprep.subr.mxu0 0.0
        %980 = vmatpush2.xpose.msra.mxu0 0.0
        %981 = vmatprep.subr.mxu0 0.0
        %982 = vmatpush2.xpose.msra.mxu0 0.0
        %983 = vmatprep.subr.mxu0 0.0
        %984 = vmatpush2.xpose.msra.mxu0 0.0
        %985 = vmatprep.subr.mxu0 0.0
        %986 = vmatpush2.xpose.msra.mxu0 0.0
        %987 = vmatprep.mubr.f32.mxu0 0.0
        %988 = vmatmul.mubr.f32.gmra.mxu0 %v919
        %v989 = vpop.f32.mrf.mxu0
        %v990 = vadd.f32 0.0, %v989
        %v991 = vpop.f32.mrf.mxu0
        %992 = vdwg.mxu0
        %v993 = vsel %vm399, %v990, -inf
        %994 = vmax.xlane.f32.xlu0 %v993
        %v995 = vpop.xlane.xlu0 %994
        %v996 = vsub.f32 %v990, %v995
        %v997 = vmul.f32 %v996, 1.442695
        %v998 = vpow.pop %v997
        %v999 = vsel %vm399, %v998, 0.0
        %1000 = vadd.xlane.f32.xlu0 %v999
        %v1001 = vpop.xlane.xlu0 %1000
        %v1002 = vrcp.pop %v1001
        %v1003 = vmul.f32 %v998, %v1002
        %s1004 = scalar_lea.vmem %s306, 24 [#allocation11]
        %1005 = vst.msk [vmem:[%s1004] sm:$0xff] %vm399, %v1003
        %1006 = vrot.lane.b32.xlu0 %v913, 40
        %v1007 = vpop.permute.xlu0 %1006
        %v1010 = vsel %vm399, %v1003, 0
        %1012 = vmatprep.subr.mxu0 0.0
        %1013 = vmatpush1.msra.mxu0 0.0
        %1014 = vmatprep.subr.mxu0 0.0
        %1015 = vmatpush1.msra.mxu0 0.0
        %1016 = vmatprep.subr.mxu0 0.0
        %1017 = vmatpush1.msra.mxu0 0.0
        %1018 = vmatprep.subr.mxu0 0.0
        %1019 = vmatpush1.msra.mxu0 0.0
        %1020 = vmatprep.subr.mxu0 0.0
        %1021 = vmatpush1.msra.mxu0 0.0
        %1022 = vmatprep.subr.mxu0 0.0
        %1023 = vmatpush1.msra.mxu0 0.0
        %1024 = vmatprep.subr.mxu0 0.0
        %1025 = vmatpush1.msra.mxu0 0.0
        %1026 = vmatprep.subr.mxu0 0.0
        %1027 = vmatpush1.msra.mxu0 0.0
        %1028 = vmatprep.subr.mxu0 0.0
        %1029 = vmatpush1.msra.mxu0 0.0
        %1030 = vmatprep.subr.mxu0 0.0
        %1031 = vmatpush1.msra.mxu0 0.0
        %1032 = vmatprep.subr.mxu0 0.0
        %1033 = vmatpush1.msra.mxu0 0.0
        %1034 = vmatprep.subr.mxu0 0.0
        %1035 = vmatpush1.msra.mxu0 0.0
        %1036 = vmatprep.subr.mxu0 0.0
        %1037 = vmatpush1.msra.mxu0 0.0
        %1038 = vmatprep.subr.mxu0 0.0
        %1039 = vmatpush1.msra.mxu0 0.0
        %1040 = vmatprep.subr.mxu0 0.0
        %1041 = vmatpush1.msra.mxu0 0.0
        %1042 = vmatprep.subr.mxu0 0.0
        %1043 = vmatpush1.msra.mxu0 %v1007
        %1044 = vmatprep.subr.mxu0 0.0
        %1045 = vmatpush2.msra.mxu0 0.0
        %1046 = vmatprep.subr.mxu0 0.0
        %1047 = vmatpush2.msra.mxu0 0.0
        %1048 = vmatprep.subr.mxu0 0.0
        %1049 = vmatpush2.msra.mxu0 0.0
        %1050 = vmatprep.subr.mxu0 0.0
        %1051 = vmatpush2.msra.mxu0 0.0
        %1052 = vmatprep.subr.mxu0 0.0
        %1053 = vmatpush2.msra.mxu0 0.0
        %1054 = vmatprep.subr.mxu0 0.0
        %1055 = vmatpush2.msra.mxu0 0.0
        %1056 = vmatprep.subr.mxu0 0.0
        %1057 = vmatpush2.msra.mxu0 0.0
        %1058 = vmatprep.subr.mxu0 0.0
        %1059 = vmatpush2.msra.mxu0 0.0
        %1060 = vmatprep.subr.mxu0 0.0
        %1061 = vmatpush2.msra.mxu0 0.0
        %1062 = vmatprep.subr.mxu0 0.0
        %1063 = vmatpush2.msra.mxu0 0.0
        %1064 = vmatprep.subr.mxu0 0.0
        %1065 = vmatpush2.msra.mxu0 0.0
        %1066 = vmatprep.subr.mxu0 0.0
        %1067 = vmatpush2.msra.mxu0 0.0
        %1068 = vmatprep.subr.mxu0 0.0
        %1069 = vmatpush2.msra.mxu0 0.0
        %1070 = vmatprep.subr.mxu0 0.0
        %1071 = vmatpush2.msra.mxu0 0.0
        %1072 = vmatprep.subr.mxu0 0.0
        %1073 = vmatpush2.msra.mxu0 0.0
        %1074 = vmatprep.subr.mxu0 0.0
        %1075 = vmatpush2.msra.mxu0 0.0
        %1076 = vmatprep.mubr.f32.mxu0 0.0
        %1077 = vmatmul.mubr.f32.gmra.mxu0 %v1010
        %v1078 = vpop.f32.mrf.mxu0
        %v1079 = vadd.f32 0.0, %v1078
        %v1080 = vpop.f32.mrf.mxu0
        %1081 = vdwg.mxu0
        %1083 = vrot.lane.b32.xlu0 %v1079, 24
        %v1084 = vpop.permute.xlu0 %1083
        %vm1086 = vcmask 261312
        %1087 = vst.msk [vmem:[#allocation3] sm:$0xff] %vm1086, %v1084
        %v1088 = vld [vmem:[#allocation3] sm:$0xff]
        %v1089 = vld [vmem:[#allocation9] sm:$0xff]
        %v1090 = vld [vmem:[#allocation9 + $0x8] sm:$0xff]
        %v1091 = vld [vmem:[#allocation9 + $0x10] sm:$0xff]
        %v1092 = vld [vmem:[#allocation9 + $0x18] sm:$0xff]
        %v1093 = vld [vmem:[%s4] sm:$0x1]
        %v1095 = vlaneseq
        %v1096 = vshrl.u32 %v1095, 7
        %v1097 = vsub.s32 0, %v1096
        %v1098 = vrot.slane %v1093, %v1097
        %v1101 = vsel %vm319, %v1088, 0
        %1103 = vmatprep.subr.mxu0 0.0
        %1104 = vmatpush1.msra.mxu0 0.0
        %1105 = vmatprep.subr.mxu0 0.0
        %1106 = vmatpush1.msra.mxu0 0.0
        %1107 = vmatprep.subr.mxu0 0.0
        %1108 = vmatpush1.msra.mxu0 0.0
        %1109 = vmatprep.subr.mxu0 0.0
        %1110 = vmatpush1.msra.mxu0 0.0
        %1111 = vmatprep.subr.mxu0 0.0
        %1112 = vmatpush1.msra.mxu0 0.0
        %1113 = vmatprep.subr.mxu0 0.0
        %1114 = vmatpush1.msra.mxu0 0.0
        %1115 = vmatprep.subr.mxu0 0.0
        %1116 = vmatpush1.msra.mxu0 0.0
        %1117 = vmatprep.subr.mxu0 0.0
        %1118 = vmatpush1.msra.mxu0 0.0
        %1119 = vmatprep.subr.mxu0 0.0
        %1120 = vmatpush1.msra.mxu0 0.0
        %1121 = vmatprep.subr.mxu0 0.0
        %1122 = vmatpush1.msra.mxu0 0.0
        %1123 = vmatprep.subr.mxu0 0.0
        %1124 = vmatpush1.msra.mxu0 0.0
        %1125 = vmatprep.subr.mxu0 0.0
        %1126 = vmatpush1.msra.mxu0 0.0
        %1127 = vmatprep.subr.mxu0 0.0
        %1128 = vmatpush1.msra.mxu0 %v1092
        %1129 = vmatprep.subr.mxu0 0.0
        %1130 = vmatpush1.msra.mxu0 %v1091
        %1131 = vmatprep.subr.mxu0 0.0
        %1132 = vmatpush1.msra.mxu0 %v1090
        %1133 = vmatprep.subr.mxu0 0.0
        %1134 = vmatpush1.msra.mxu0 %v1089
        %1135 = vmatprep.subr.mxu0 0.0
        %1136 = vmatpush2.msra.mxu0 0.0
        %1137 = vmatprep.subr.mxu0 0.0
        %1138 = vmatpush2.msra.mxu0 0.0
        %1139 = vmatprep.subr.mxu0 0.0
        %1140 = vmatpush2.msra.mxu0 0.0
        %1141 = vmatprep.subr.mxu0 0.0
        %1142 = vmatpush2.msra.mxu0 0.0
        %1143 = vmatprep.subr.mxu0 0.0
        %1144 = vmatpush2.msra.mxu0 0.0
        %1145 = vmatprep.subr.mxu0 0.0
        %1146 = vmatpush2.msra.mxu0 0.0
        %1147 = vmatprep.subr.mxu0 0.0
        %1148 = vmatpush2.msra.mxu0 0.0
        %1149 = vmatprep.subr.mxu0 0.0
        %1150 = vmatpush2.msra.mxu0 0.0
        %1151 = vmatprep.subr.mxu0 0.0
        %1152 = vmatpush2.msra.mxu0 0.0
        %1153 = vmatprep.subr.mxu0 0.0
        %1154 = vmatpush2.msra.mxu0 0.0
        %1155 = vmatprep.subr.mxu0 0.0
        %1156 = vmatpush2.msra.mxu0 0.0
        %1157 = vmatprep.subr.mxu0 0.0
        %1158 = vmatpush2.msra.mxu0 0.0
        %1159 = vmatprep.subr.mxu0 0.0
        %1160 = vmatpush2.msra.mxu0 0.0
        %1161 = vmatprep.subr.mxu0 0.0
        %1162 = vmatpush2.msra.mxu0 0.0
        %1163 = vmatprep.subr.mxu0 0.0
        %1164 = vmatpush2.msra.mxu0 0.0
        %1165 = vmatprep.subr.mxu0 0.0
        %1166 = vmatpush2.msra.mxu0 0.0
        %1167 = vmatprep.mubr.f32.mxu0 0.0
        %1168 = vmatmul.mubr.f32.gmra.mxu0 %v1101
        %v1169 = vpop.f32.mrf.mxu0
        %v1170 = vadd.f32 %v1098, %v1169
        %v1171 = vpop.f32.mrf.mxu0
        %1172 = vdwg.mxu0
        %1173 = vst.msk [vmem:[%s299] sm:$0xff] %vm319, %v1170
        %s1174 = sand.u32 %s146, 1
        %s1175 = scalar_lea.sflag [#allocation6], %s1174
        %s1176 = sand.u32 %s146, 1
        %s1177 = smul.addr %s1176, 8
        %s1178 = scalar_lea.vmem [#allocation10], %s1177
        %s1179 = sand.u32 %s172, 1
        %s1180 = scalar_lea.sflag [#allocation12], %s1179
        %s1181 = sand.u32 %s172, 1
        %s1182 = smul.addr %s1181, 32
        %s1183 = scalar_lea.vmem [#allocation11], %s1182
        // Predicated region
        $region53: #{tpu_custom_call.1} parent=39 // pred_check
          %p1184 = pneg %p156
        $region54: #{tpu_custom_call.1} parent=39 // pred_check_branch
          %1186 = sbr.rel (%p1184) target = $region56
        $region55: #{tpu_custom_call.1} parent=39 // pred_region
          %s1188 = ssub.s32 128, 128
          %1189 = vsyncadd %s1175, %s1188
          %s1190 = smul.addr %s28, 128
          %s1191 = scalar_lea.hbm %s5, %s1190
          %s1193 = sshll.u32 %s1178, 4
          %s1194 = int_to_ptr.vmem [resolvable:$true] %s1193
          %1196 = dma.vmem_to_hbm [thread:$0]  %s1194, 128, %s1191, %s1175
        $region56: #{tpu_custom_call.1} parent=39 // pred_fallthru
          _
        // Predicated region
        $region57: #{tpu_custom_call.1} parent=39 // pred_check
          %p1197 = pneg %p182
        $region58: #{tpu_custom_call.1} parent=39 // pred_check_branch
          %1199 = sbr.rel (%p1197) target = $region60
        $region59: #{tpu_custom_call.1} parent=39 // pred_region
          %s1201 = ssub.s32 512, 512
          %1202 = vsyncadd %s1180, %s1201
          %s1203 = smul.addr %s28, 4
          %s1204 = smul.addr %s1203, 128
          %s1205 = scalar_lea.hbm %s6, %s1204
          %s1206 = sshll.u32 %s1183, 4
          %s1207 = int_to_ptr.vmem [resolvable:$true] %s1206
          %1212 = dma.vmem_to_hbm [thread:$0]  %s1207, 512, %s1205, %s1180, 128, 128, 8
        $region60: #{tpu_custom_call.1} parent=39 // pred_fallthru
          _
      $region40: #{tpu_custom_call.1} parent=5 // pred_fallthru
        _
      %p1213 = scmp.le.s32.totalorder 2, %s23
      // Predicated region
      $region61: #{tpu_custom_call.1} parent=5 // pred_check
        %p1214 = pneg %p1213
      $region62: #{tpu_custom_call.1} parent=5 // pred_check_branch
        %1216 = sbr.rel (%p1214) target = $region64
      $region63: #{tpu_custom_call.1} parent=5 // pred_region
        %s1217 = ssub.s32 %s23, 2
        // Predicated region
        $region65: #{tpu_custom_call.1} parent=63 // pred_check
          %p1218 = pneg %p162
        $region66: #{tpu_custom_call.1} parent=63 // pred_check_branch
          %1220 = sbr.rel (%p1218) target = $region68
        $region67: #{tpu_custom_call.1} parent=63 // pred_region
          %s1221 = sand.u32 %s147, 1
          %s1222 = scalar_lea.sflag [#allocation6], %s1221
          %s1223 = sand.u32 %s147, 1
          %s1224 = smul.addr %s1223, 8
          %s1225 = scalar_lea.vmem [#allocation10], %s1224
          %1226 = dma.done %s1222, 128
        $region68: #{tpu_custom_call.1} parent=63 // pred_fallthru
          _
        // Predicated region
        $region69: #{tpu_custom_call.1} parent=63 // pred_check
          %p1227 = pneg %p188
        $region70: #{tpu_custom_call.1} parent=63 // pred_check_branch
          %1229 = sbr.rel (%p1227) target = $region72
        $region71: #{tpu_custom_call.1} parent=63 // pred_region
          %s1230 = sand.u32 %s173, 1
          %s1231 = scalar_lea.sflag [#allocation12], %s1230
          %s1232 = sand.u32 %s173, 1
          %s1233 = smul.addr %s1232, 32
          %s1234 = scalar_lea.vmem [#allocation11], %s1233
          %1235 = dma.done %s1231, 512
        $region72: #{tpu_custom_call.1} parent=63 // pred_fallthru
          _
      $region64: #{tpu_custom_call.1} parent=5 // pred_fallthru
        _
    $region6: #{tpu_custom_call.1} parent=1 // loop_footer
      %s27 = sadd.s32 1, %s23
    $region7: #{tpu_custom_call.1} parent=1 // loop_footer_branch
      %22 = sbr.rel target = $region3
    $region8: #{tpu_custom_call.1} parent=1 // loop_exit
      _
    %1236 = vsyncpa [#allocation5], 1
    %s1237 = scalar_lea.sflag [#allocation5], 1
    %1238 = vsyncpa %s1237, 1
    %1239 = vsyncpa [#allocation8], 1
    %1240 = vsyncpa [#allocation6], 1
    %s1241 = scalar_lea.sflag [#allocation6], 1
    %1242 = vsyncpa %s1241, 1
    %1243 = vsyncpa [#allocation12], 1
    %s1244 = scalar_lea.sflag [#allocation12], 1
    %1245 = vsyncpa %s1244, 1

</llo_original>
